<compile_context>
chip_gen: v7x
topology: tpu7x:2x2x1
jax: 0.10.0
libtpu: 0.0.40
codegen_flags: <defaults>
</compile_context>

<pallas_src>
import functools
import math

import numpy as np

import jax
import jax.numpy as jnp
from jax.experimental import pallas as pl
from jax.experimental.pallas import tpu as pltpu


# ---------------------------------------------------------------------------
# Tiling helpers
# ---------------------------------------------------------------------------
def _choose_tile(hw, w, c, itemsize, batch):
  """Lane tile over one image's flattened H*W.

  Must be a multiple of the 4*W pooling strip (so 2x2 / 4x4 pool windows never
  straddle a tile boundary) and a multiple of 128 lanes (or the full extent).
  Sized so double-buffered I/O + ~35 rows of f32 in-kernel temporaries stay
  around ~16 MiB, and (when possible) so the grid has >=2 steps for megacore.
  """
  strip = 4 * w
  per_col = 16 * c * itemsize + 150 * c       # dbuf I/O + f32 temporaries
  tmax = max(strip, (16 << 20) // per_col)
  best = 0
  t = strip
  lim = min(hw, tmax)
  while t <= lim:                             # prefer exact divisors (no pad)
    if hw % t == 0 and (t % 128 == 0 or t == hw):
      best = t
    t += strip
  if best == 0:                               # no clean divisor: pad instead
    g = strip * 128 // math.gcd(strip, 128)   # lcm(4W, 128)
    best = min(max(g, (tmax // g) * g), ((hw + g - 1) // g) * g)
  # prefer >=2 total grid steps (v7x megacore) when it costs nothing
  if batch * ((hw + best - 1) // best) < 2 and hw >= 2 * strip:
    half = (hw // 2) // strip * strip
    if half and hw % half == 0 and (half % 128 == 0 or half == hw):
      best = half
  return best


def _vmem_limit(est_bytes):
  # include headroom for Mosaic internal scratch; clamp for v7x (64 MiB / TC)
  return int(min(max(est_bytes + (8 << 20), 32 << 20), 48 << 20))


def _build_masks(tn, w):
  """Per-lane selection masks for the in-kernel pooling (period 4*W, and tiles
  start at 4-row-aligned offsets, so one tile's worth covers every tile)."""
  lane = np.arange(tn)
  wi = lane % w          # column within a row
  ri = lane // w         # row within the tile (parity == global parity)
  m = np.stack([(wi % 2 == 0), (ri % 2 == 0),
                (wi % 4 < 2), (ri % 4 < 2)]).astype(np.float32)
  return jnp.asarray(m)                        # (4, tn) float32


# ---------------------------------------------------------------------------
# Fused kernel (channel-major tiles: activations are (C, tn), weights stacked)
# ---------------------------------------------------------------------------
def _fused_kernel(x1_ref, x2_ref, x3_ref, sh_ref, masks_ref,
                  w_msc4_ref, b_msc4_ref, w_fuse_ref, b_fuse_ref,
                  w_mscs_ref, b_mscs_ref, w_dns_ref, w_dxm_ref, b_dist_ref,
                  o1_ref, o2_ref, o3_ref, osh_ref, *, c, w):
  f32 = jnp.float32
  cd = x1_ref.dtype

  m = masks_ref[...]
  col2 = m[0:1] > 0.5     # column is the low element of its 2-window
  row2 = m[1:2] > 0.5     # row    is the low element of its 2-window
  col4 = m[2:3] > 0.5     # column is in the low half of its 4-window
  row4 = m[3:4] > 0.5     # row    is in the low half of its 4-window

  def win(y, dist, low):
    # Aligned-window max + broadcast back to every position of the window,
    # done purely with lane rotations (XLU) + one select.
    # pltpu.roll follows jnp.roll semantics: roll(y, -d)[i] == y[i + d].
    n_l = y.shape[1]
    s = jnp.maximum(y, pltpu.roll(y, (-dist) % n_l, axis=1))
    return jnp.where(low, s, pltpu.roll(s, dist, axis=1))

  def pool_bcast(y):
    # nearest-upsampled 2x2 / 4x4 max-pools of y (rows = flattened (h, w))
    p2 = win(win(y, 1, col2), w, row2)
    p4 = win(win(p2, 2, col4), 2 * w, row4)
    return p2, p4

  # ---- phase 1: four MSC residuals + gated fusion --------------------------
  x_cd = jnp.concatenate([x1_ref[...], x2_ref[...], x3_ref[...], sh_ref[...]],
                         axis=0)                                    # (4C, tn)
  xf = x_cd.astype(f32)
  p2, p4 = pool_bcast(xf)
  pre = (jnp.dot(w_msc4_ref[0], x_cd, preferred_element_type=f32)
         + jnp.dot(w_msc4_ref[1], p2.astype(cd), preferred_element_type=f32)
         + jnp.dot(w_msc4_ref[2], p4.astype(cd), preferred_element_type=f32)
         + b_msc4_ref[...])
  xm = xf + jnp.maximum(pre, 0.0)            # [x1_m; x2_m; x3_m; shared_m]
  xm_cd = xm.astype(cd)

  g = jax.nn.sigmoid(jnp.dot(w_fuse_ref[...], xm_cd, preferred_element_type=f32)
                     + b_fuse_ref[...])                             # (3C, tn)
  prod = xm[:3 * c] * g
  ns = xf[3 * c:] + prod[:c] + prod[c:2 * c] + prod[2 * c:]         # new_shared
  ns_cd = ns.astype(cd)

  # ---- phase 2: new_shared MSC residual + gated distribution ---------------
  q2, q4 = pool_bcast(ns)
  pre_s = (jnp.dot(w_mscs_ref[0], ns_cd, preferred_element_type=f32)
           + jnp.dot(w_mscs_ref[1], q2.astype(cd), preferred_element_type=f32)
           + jnp.dot(w_mscs_ref[2], q4.astype(cd), preferred_element_type=f32)
           + b_mscs_ref[...])
  nsm = ns + jnp.maximum(pre_s, 0.0)                                # new_shared_m
  gd = jax.nn.sigmoid(
      jnp.dot(w_dns_ref[...], nsm.astype(cd), preferred_element_type=f32)
      + jnp.dot(w_dxm_ref[...], xm_cd[:3 * c], preferred_element_type=f32)
      + b_dist_ref[...])                                            # (3C, tn)

  o1_ref[...] = (xf[:c] + nsm * gd[:c]).astype(o1_ref.dtype)
  o2_ref[...] = (xf[c:2 * c] + nsm * gd[c:2 * c]).astype(o2_ref.dtype)
  o3_ref[...] = (xf[2 * c:3 * c] + nsm * gd[2 * c:3 * c]).astype(o3_ref.dtype)
  osh_ref[...] = ns.astype(osh_ref.dtype)


# ---------------------------------------------------------------------------
# Weight packing (block-diagonal / block-structured stacked matrices)
# ---------------------------------------------------------------------------
def _block_diag(blocks):
  c = blocks[0].shape[0]
  n = len(blocks)
  z = jnp.zeros((c, c), blocks[0].dtype)
  rows = [jnp.concatenate([blk if j == i else z for j in range(n)], axis=1)
          for i, blk in enumerate(blocks)]
  return jnp.concatenate(rows, axis=0)


def _pack_weights(params, c, cd):
  z = jnp.zeros((c, c), jnp.float32)
  msc_keys = ("m1_msc", "m2_msc", "m3_msc", "shared_fuse_msc")

  w_msc4 = jnp.stack([_block_diag([params[k][n] for k in msc_keys])
                      for n in ("w0", "w1", "w2")]).astype(cd)       # (3,4C,4C)
  b_msc4 = jnp.concatenate([params[k]["b"] for k in msc_keys], axis=0)  # (4C,1)

  fuse_keys = ("m1_fuse", "m2_fuse", "m3_fuse")
  fuse_rows = []
  for i, k in enumerate(fuse_keys):
    wa, wb = params[k]["w"][0], params[k]["w"][1]     # gate(x_i_m, shared_m)
    cols = [wa if j == i else (wb if j == 3 else z) for j in range(4)]
    fuse_rows.append(jnp.concatenate(cols, axis=1))
  w_fuse = jnp.concatenate(fuse_rows, axis=0).astype(cd)             # (3C,4C)
  b_fuse = jnp.concatenate([params[k]["b"] for k in fuse_keys], axis=0)

  psd = params["shared_distribute_msc"]
  w_mscs = jnp.stack([psd["w0"], psd["w1"], psd["w2"]]).astype(cd)   # (3,C,C)
  b_mscs = psd["b"]

  dist_keys = ("m1_distribute", "m2_distribute", "m3_distribute")
  w_dns = jnp.concatenate([params[k]["w"][0] for k in dist_keys],
                          axis=0).astype(cd)                         # (3C,C)
  w_dxm = _block_diag([params[k]["w"][1] for k in dist_keys]).astype(cd)
  b_dist = jnp.concatenate([params[k]["b"] for k in dist_keys], axis=0)

  return (w_msc4, b_msc4, w_fuse, b_fuse, w_mscs, b_mscs,
          w_dns, w_dxm, b_dist)


# ---------------------------------------------------------------------------
# Block_rgbt_2to1 forward (first_block=False, init_cam=False defaults)
# ---------------------------------------------------------------------------
def block_rgbt_2to1_forward(x1, x2, x3, shared, params):
  """Inputs / outputs are NCHW.  Storage / matmul dtype = input dtype
  (pass bf16 inputs for the bandwidth-optimal path); accumulation is f32."""
  b, c, h, w = x1.shape
  assert h % 4 == 0 and w % 4 == 0, "MSC pooling needs H, W divisible by 4"
  cd = x1.dtype
  isz = jnp.dtype(cd).itemsize
  hw = h * w

  tn = _choose_tile(hw, w, c, isz, b)
  hw_pad = pl.cdiv(hw, tn) * tn

  def prep(t):                                   # free reshape, pad only if needed
    t = t.reshape(b, c, hw).astype(cd)
    if hw_pad != hw:
      t = jnp.pad(t, ((0, 0), (0, 0), (0, hw_pad - hw)))
    return t

  xs = [prep(t) for t in (x1, x2, x3, shared)]
  masks = _build_masks(tn, w)
  weights = _pack_weights(params, c, cd)

  row_spec = pl.BlockSpec((None, c, tn), lambda bi, ni: (bi, 0, ni))

  def const_spec(a):
    nd = a.ndim
    return pl.BlockSpec(a.shape, lambda bi, ni, _nd=nd: (0,) * _nd)

  const_bytes = 2 * (int(masks.size) * masks.dtype.itemsize
                     + sum(int(a.size) * a.dtype.itemsize for a in weights))
  est = 16 * c * tn * isz + const_bytes + 40 * c * tn * 4   # I/O + f32 temps

  outs = pl.pallas_call(
      functools.partial(_fused_kernel, c=c, w=w),
      out_shape=tuple(jax.ShapeDtypeStruct((b, c, hw_pad), cd)
                      for _ in range(4)),
      grid_spec=pltpu.PrefetchScalarGridSpec(
          num_scalar_prefetch=0,
          grid=(b, hw_pad // tn),
          in_specs=[row_spec] * 4 + [const_spec(masks)]
                   + [const_spec(a) for a in weights],
          out_specs=[row_spec] * 4),
      compiler_params=pltpu.CompilerParams(
          dimension_semantics=("parallel", "parallel"),
          vmem_limit_bytes=_vmem_limit(est)),
  )(*xs, masks, *weights)

  def unprep(t):
    return t[:, :, :hw].reshape(b, c, h, w)

  nx1, nx2, nx3, new_shared = (unprep(t) for t in outs)
  return nx1, nx2, nx3, new_shared


# ---------------------------------------------------------------------------
# Deterministic parameter init (shapes follow the torch module __init__)
# ---------------------------------------------------------------------------
def init_params(key, c):
  scale = 0.2

  def msc_p(k):
    # Conv2d(3C, C, 1): (Cout, 3Cin) split into (Cout,Cin) blocks for
    # [x | up2(pool2 x) | up4(pool4 x)], plus bias (C,1).
    k0, k1, k2, k3 = jax.random.split(k, 4)
    return {"w0": scale * jax.random.normal(k0, (c, c), jnp.float32),
            "w1": scale * jax.random.normal(k1, (c, c), jnp.float32),
            "w2": scale * jax.random.normal(k2, (c, c), jnp.float32),
            "b": scale * jax.random.normal(k3, (c, 1), jnp.float32)}

  def gate_p(k):
    # Conv2d(2C, C, 1): stacked (2, Cout, Cin) = [first concat block, second].
    ka, kb = jax.random.split(k, 2)
    return {"w": scale * jax.random.normal(ka, (2, c, c), jnp.float32),
            "b": scale * jax.random.normal(kb, (c, 1), jnp.float32)}

  ks = jax.random.split(key, 11)
  return {"m1_msc": msc_p(ks[0]), "m2_msc": msc_p(ks[1]), "m3_msc": msc_p(ks[2]),
          "shared_fuse_msc": msc_p(ks[3]), "shared_distribute_msc": msc_p(ks[4]),
          "m1_fuse": gate_p(ks[5]), "m2_fuse": gate_p(ks[6]),
          "m3_fuse": gate_p(ks[7]),
          "m1_distribute": gate_p(ks[8]), "m2_distribute": gate_p(ks[9]),
          "m3_distribute": gate_p(ks[10])}


# ---------------------------------------------------------------------------
# Pure-JAX reference (mirrors the torch forward) for self-checking
# ---------------------------------------------------------------------------
def _maxpool_nchw(x, k):
  b, c, h, w = x.shape
  return jnp.max(x.reshape(b, c, h // k, k, w // k, k), axis=(3, 5))


def _reference_forward(x1, x2, x3, shared, params):
  hi = jax.lax.Precision.HIGHEST

  def conv1x1(x, w_, b_=None):
    y = jnp.einsum("bchw,oc->bohw", x, w_, precision=hi)
    return y if b_ is None else y + b_.reshape(1, -1, 1, 1)

  def up(x, k):
    return jnp.repeat(jnp.repeat(x, k, axis=2), k, axis=3)

  def msc(x, p):
    u1 = up(_maxpool_nchw(x, 2), 2)
    u2 = up(_maxpool_nchw(x, 4), 4)
    pre = (conv1x1(x, p["w0"]) + conv1x1(u1, p["w1"]) + conv1x1(u2, p["w2"])
           + p["b"].reshape(1, -1, 1, 1))
    return jnp.maximum(pre, 0.0)

  def gate(a, b_, p):
    cat = jnp.concatenate([a, b_], axis=1)
    w_full = jnp.concatenate([p["w"][0], p["w"][1]], axis=1)
    return jax.nn.sigmoid(conv1x1(cat, w_full, p["b"]))

  x1_m = x1 + msc(x1, params["m1_msc"])
  x2_m = x2 + msc(x2, params["m2_msc"])
  x3_m = x3 + msc(x3, params["m3_msc"])
  shared_m = shared + msc(shared, params["shared_fuse_msc"])
  new_shared = (shared
                + x1_m * gate(x1_m, shared_m, params["m1_fuse"])
                + x2_m * gate(x2_m, shared_m, params["m2_fuse"])
                + x3_m * gate(x3_m, shared_m, params["m3_fuse"]))
  new_shared_m = new_shared + msc(new_shared, params["shared_distribute_msc"])
  nx1 = x1 + new_shared_m * gate(new_shared_m, x1_m, params["m1_distribute"])
  nx2 = x2 + new_shared_m * gate(new_shared_m, x2_m, params["m2_distribute"])
  nx3 = x3 + new_shared_m * gate(new_shared_m, x3_m, params["m3_distribute"])
  return nx1, nx2, nx3, new_shared


# ---------------------------------------------------------------------------
if __name__ == "__main__":
  B, C, H, W = 2, 8, 16, 16
  key = jax.random.PRNGKey(0)
  kx1, kx2, kx3, ksh, kp = jax.random.split(key, 5)

  x1 = jax.random.normal(kx1, (B, C, H, W), jnp.float32)
  x2 = jax.random.normal(kx2, (B, C, H, W), jnp.float32)
  x3 = jax.random.normal(kx3, (B, C, H, W), jnp.float32)
  sh = jax.random.normal(ksh, (B, C, H, W), jnp.float32)
  params = init_params(kp, C)

  refs = _reference_forward(x1, x2, x3, sh, params)
  fwd = jax.jit(block_rgbt_2to1_forward)

  # float32 path: strict correctness check
  outs = jax.block_until_ready(fwd(x1, x2, x3, sh, params))
  for o, r in zip(outs, refs):
    err = float(jnp.max(jnp.abs(o.astype(jnp.float32) - r)))
    assert err < 1e-2, f"f32 mismatch vs reference: {err}"

  # bf16 end-to-end path (halved HBM traffic): loose sanity check only
  outs_b = jax.block_until_ready(
      fwd(x1.astype(jnp.bfloat16), x2.astype(jnp.bfloat16),
          x3.astype(jnp.bfloat16), sh.astype(jnp.bfloat16), params))
  for o, r in zip(outs_b, refs):
    of = o.astype(jnp.float32)
    assert bool(jnp.all(jnp.isfinite(of))), "bf16 path produced non-finite values"
    mean_err = float(jnp.mean(jnp.abs(of - r)))
    assert mean_err < 0.1, f"bf16 sanity check failed: mean err {mean_err}"

  print("KERNEL_OK")
</pallas_src>

<mosaic_0001>
module attributes {stable_mosaic.version = 11 : i64} {
  func.func @_fused_kernel(%arg0: i32, %arg1: i32, %arg2: memref<1x8x256xf32, #tpu.memory_space<vmem>>, %arg3: memref<1x8x256xf32, #tpu.memory_space<vmem>>, %arg4: memref<1x8x256xf32, #tpu.memory_space<vmem>>, %arg5: memref<1x8x256xf32, #tpu.memory_space<vmem>>, %arg6: memref<4x256xf32, #tpu.memory_space<vmem>>, %arg7: memref<3x32x32xf32, #tpu.memory_space<vmem>>, %arg8: memref<32x1xf32, #tpu.memory_space<vmem>>, %arg9: memref<24x32xf32, #tpu.memory_space<vmem>>, %arg10: memref<24x1xf32, #tpu.memory_space<vmem>>, %arg11: memref<3x8x8xf32, #tpu.memory_space<vmem>>, %arg12: memref<8x1xf32, #tpu.memory_space<vmem>>, %arg13: memref<24x8xf32, #tpu.memory_space<vmem>>, %arg14: memref<24x24xf32, #tpu.memory_space<vmem>>, %arg15: memref<24x1xf32, #tpu.memory_space<vmem>>, %arg16: memref<1x8x256xf32, #tpu.memory_space<vmem>>, %arg17: memref<1x8x256xf32, #tpu.memory_space<vmem>>, %arg18: memref<1x8x256xf32, #tpu.memory_space<vmem>>, %arg19: memref<1x8x256xf32, #tpu.memory_space<vmem>>) attributes {dimension_semantics = [#tpu.dimension_semantics<parallel>, #tpu.dimension_semantics<parallel>], iteration_bounds = array<i64: 2, 1>, scalar_prefetch = 0 : i64, scratch_operands = 0 : i64, tpu.core_type = #tpu.core_type<tc>, window_params = [{transform_indices = @transform_0, window_bounds = array<i64: 1, 8, 256>}, {transform_indices = @transform_1, window_bounds = array<i64: 1, 8, 256>}, {transform_indices = @transform_2, window_bounds = array<i64: 1, 8, 256>}, {transform_indices = @transform_3, window_bounds = array<i64: 1, 8, 256>}, {pipeline_mode = #tpu.pipeline_mode<synchronous>, transform_indices = @transform_4, window_bounds = array<i64: 4, 256>}, {pipeline_mode = #tpu.pipeline_mode<synchronous>, transform_indices = @transform_5, window_bounds = array<i64: 3, 32, 32>}, {pipeline_mode = #tpu.pipeline_mode<synchronous>, transform_indices = @transform_6, window_bounds = array<i64: 32, 1>}, {pipeline_mode = #tpu.pipeline_mode<synchronous>, transform_indices = @transform_7, window_bounds = array<i64: 24, 32>}, {pipeline_mode = #tpu.pipeline_mode<synchronous>, transform_indices = @transform_8, window_bounds = array<i64: 24, 1>}, {pipeline_mode = #tpu.pipeline_mode<synchronous>, transform_indices = @transform_9, window_bounds = array<i64: 3, 8, 8>}, {pipeline_mode = #tpu.pipeline_mode<synchronous>, transform_indices = @transform_10, window_bounds = array<i64: 8, 1>}, {pipeline_mode = #tpu.pipeline_mode<synchronous>, transform_indices = @transform_11, window_bounds = array<i64: 24, 8>}, {pipeline_mode = #tpu.pipeline_mode<synchronous>, transform_indices = @transform_12, window_bounds = array<i64: 24, 24>}, {pipeline_mode = #tpu.pipeline_mode<synchronous>, transform_indices = @transform_13, window_bounds = array<i64: 24, 1>}, {transform_indices = @transform_14, window_bounds = array<i64: 1, 8, 256>}, {transform_indices = @transform_15, window_bounds = array<i64: 1, 8, 256>}, {transform_indices = @transform_16, window_bounds = array<i64: 1, 8, 256>}, {transform_indices = @transform_17, window_bounds = array<i64: 1, 8, 256>}]} {
    %c0 = arith.constant 0 : index
    %c0_0 = arith.constant 0 : index
    %0 = vector.load %arg6[%c0, %c0_0] : memref<4x256xf32, #tpu.memory_space<vmem>>, vector<4x256xf32>
    %1 = vector.extract_strided_slice %0 {offsets = [0, 0], sizes = [1, 256], strides = [1, 1]} : vector<4x256xf32> to vector<1x256xf32>
    %cst = arith.constant 5.000000e-01 : f32
    %2 = vector.broadcast %cst : f32 to vector<1x256xf32>
    %3 = arith.cmpf ogt, %1, %2 : vector<1x256xf32>
    %4 = vector.extract_strided_slice %0 {offsets = [1, 0], sizes = [1, 256], strides = [1, 1]} : vector<4x256xf32> to vector<1x256xf32>
    %cst_1 = arith.constant 5.000000e-01 : f32
    %5 = vector.broadcast %cst_1 : f32 to vector<1x256xf32>
    %6 = arith.cmpf ogt, %4, %5 : vector<1x256xf32>
    %7 = vector.extract_strided_slice %0 {offsets = [2, 0], sizes = [1, 256], strides = [1, 1]} : vector<4x256xf32> to vector<1x256xf32>
    %cst_2 = arith.constant 5.000000e-01 : f32
    %8 = vector.broadcast %cst_2 : f32 to vector<1x256xf32>
    %9 = arith.cmpf ogt, %7, %8 : vector<1x256xf32>
    %10 = vector.extract_strided_slice %0 {offsets = [3, 0], sizes = [1, 256], strides = [1, 1]} : vector<4x256xf32> to vector<1x256xf32>
    %cst_3 = arith.constant 5.000000e-01 : f32
    %11 = vector.broadcast %cst_3 : f32 to vector<1x256xf32>
    %12 = arith.cmpf ogt, %10, %11 : vector<1x256xf32>
    %c0_4 = arith.constant 0 : index
    %c0_5 = arith.constant 0 : index
    %c0_6 = arith.constant 0 : index
    %13 = vector.load %arg2[%c0_4, %c0_5, %c0_6] : memref<1x8x256xf32, #tpu.memory_space<vmem>>, vector<1x8x256xf32>
    %14 = vector.shape_cast %13 : vector<1x8x256xf32> to vector<8x256xf32>
    %c0_7 = arith.constant 0 : index
    %c0_8 = arith.constant 0 : index
    %c0_9 = arith.constant 0 : index
    %15 = vector.load %arg3[%c0_7, %c0_8, %c0_9] : memref<1x8x256xf32, #tpu.memory_space<vmem>>, vector<1x8x256xf32>
    %16 = vector.shape_cast %15 : vector<1x8x256xf32> to vector<8x256xf32>
    %c0_10 = arith.constant 0 : index
    %c0_11 = arith.constant 0 : index
    %c0_12 = arith.constant 0 : index
    %17 = vector.load %arg4[%c0_10, %c0_11, %c0_12] : memref<1x8x256xf32, #tpu.memory_space<vmem>>, vector<1x8x256xf32>
    %18 = vector.shape_cast %17 : vector<1x8x256xf32> to vector<8x256xf32>
    %c0_13 = arith.constant 0 : index
    %c0_14 = arith.constant 0 : index
    %c0_15 = arith.constant 0 : index
    %19 = vector.load %arg5[%c0_13, %c0_14, %c0_15] : memref<1x8x256xf32, #tpu.memory_space<vmem>>, vector<1x8x256xf32>
    %20 = vector.shape_cast %19 : vector<1x8x256xf32> to vector<8x256xf32>
    %21 = tpu.concatenate %14, %16, %18, %20 in 0 : vector<8x256xf32>, vector<8x256xf32>, vector<8x256xf32>, vector<8x256xf32> -> vector<32x256xf32>
    %c255_i32 = arith.constant 255 : i32
    %22 = tpu.dynamic_rotate %21 by %c255_i32 dim 1 : vector<32x256xf32>, i32 -> vector<32x256xf32>
    %23 = arith.maximumf %21, %22 : vector<32x256xf32>
    %c1_i32 = arith.constant 1 : i32
    %24 = tpu.dynamic_rotate %23 by %c1_i32 dim 1 : vector<32x256xf32>, i32 -> vector<32x256xf32>
    %25 = vector.shape_cast %3 : vector<1x256xi1> to vector<1x256xi1>
    %26 = vector.broadcast %25 : vector<1x256xi1> to vector<32x256xi1>
    %27 = arith.select %26, %23, %24 : vector<32x256xi1>, vector<32x256xf32>
    %c240_i32 = arith.constant 240 : i32
    %28 = tpu.dynamic_rotate %27 by %c240_i32 dim 1 : vector<32x256xf32>, i32 -> vector<32x256xf32>
    %29 = arith.maximumf %27, %28 : vector<32x256xf32>
    %c16_i32 = arith.constant 16 : i32
    %30 = tpu.dynamic_rotate %29 by %c16_i32 dim 1 : vector<32x256xf32>, i32 -> vector<32x256xf32>
    %31 = vector.shape_cast %6 : vector<1x256xi1> to vector<1x256xi1>
    %32 = vector.broadcast %31 : vector<1x256xi1> to vector<32x256xi1>
    %33 = arith.select %32, %29, %30 : vector<32x256xi1>, vector<32x256xf32>
    %c254_i32 = arith.constant 254 : i32
    %34 = tpu.dynamic_rotate %33 by %c254_i32 dim 1 : vector<32x256xf32>, i32 -> vector<32x256xf32>
    %35 = arith.maximumf %33, %34 : vector<32x256xf32>
    %c2_i32 = arith.constant 2 : i32
    %36 = tpu.dynamic_rotate %35 by %c2_i32 dim 1 : vector<32x256xf32>, i32 -> vector<32x256xf32>
    %37 = vector.shape_cast %9 : vector<1x256xi1> to vector<1x256xi1>
    %38 = vector.broadcast %37 : vector<1x256xi1> to vector<32x256xi1>
    %39 = arith.select %38, %35, %36 : vector<32x256xi1>, vector<32x256xf32>
    %c224_i32 = arith.constant 224 : i32
    %40 = tpu.dynamic_rotate %39 by %c224_i32 dim 1 : vector<32x256xf32>, i32 -> vector<32x256xf32>
    %41 = arith.maximumf %39, %40 : vector<32x256xf32>
    %c32_i32 = arith.constant 32 : i32
    %42 = tpu.dynamic_rotate %41 by %c32_i32 dim 1 : vector<32x256xf32>, i32 -> vector<32x256xf32>
    %43 = vector.shape_cast %12 : vector<1x256xi1> to vector<1x256xi1>
    %44 = vector.broadcast %43 : vector<1x256xi1> to vector<32x256xi1>
    %45 = arith.select %44, %41, %42 : vector<32x256xi1>, vector<32x256xf32>
    %c0_16 = arith.constant 0 : index
    %c0_17 = arith.constant 0 : index
    %c0_18 = arith.constant 0 : index
    %46 = vector.load %arg7[%c0_16, %c0_17, %c0_18] : memref<3x32x32xf32, #tpu.memory_space<vmem>>, vector<1x32x32xf32>
    %47 = vector.shape_cast %46 : vector<1x32x32xf32> to vector<32x32xf32>
    %cst_19 = arith.constant dense<0.000000e+00> : vector<32x256xf32>
    %48 = tpu.matmul %47, %21, %cst_19 {dimension_numbers = #tpu.dot_dimension_numbers<[1], [0], [0], [1], [0, 0, 1, 1], [], []>} : vector<32x32xf32>, vector<32x256xf32>, vector<32x256xf32> -> vector<32x256xf32>
    %c1 = arith.constant 1 : index
    %c0_20 = arith.constant 0 : index
    %c0_21 = arith.constant 0 : index
    %49 = vector.load %arg7[%c1, %c0_20, %c0_21] : memref<3x32x32xf32, #tpu.memory_space<vmem>>, vector<1x32x32xf32>
    %50 = vector.shape_cast %49 : vector<1x32x32xf32> to vector<32x32xf32>
    %cst_22 = arith.constant dense<0.000000e+00> : vector<32x256xf32>
    %51 = tpu.matmul %50, %33, %cst_22 {dimension_numbers = #tpu.dot_dimension_numbers<[1], [0], [0], [1], [0, 0, 1, 1], [], []>} : vector<32x32xf32>, vector<32x256xf32>, vector<32x256xf32> -> vector<32x256xf32>
    %52 = arith.addf %48, %51 : vector<32x256xf32>
    %c2 = arith.constant 2 : index
    %c0_23 = arith.constant 0 : index
    %c0_24 = arith.constant 0 : index
    %53 = vector.load %arg7[%c2, %c0_23, %c0_24] : memref<3x32x32xf32, #tpu.memory_space<vmem>>, vector<1x32x32xf32>
    %54 = vector.shape_cast %53 : vector<1x32x32xf32> to vector<32x32xf32>
    %cst_25 = arith.constant dense<0.000000e+00> : vector<32x256xf32>
    %55 = tpu.matmul %54, %45, %cst_25 {dimension_numbers = #tpu.dot_dimension_numbers<[1], [0], [0], [1], [0, 0, 1, 1], [], []>} : vector<32x32xf32>, vector<32x256xf32>, vector<32x256xf32> -> vector<32x256xf32>
    %56 = arith.addf %52, %55 : vector<32x256xf32>
    %c0_26 = arith.constant 0 : index
    %c0_27 = arith.constant 0 : index
    %57 = vector.load %arg8[%c0_26, %c0_27] : memref<32x1xf32, #tpu.memory_space<vmem>>, vector<32x1xf32>
    %58 = vector.broadcast %57 : vector<32x1xf32> to vector<32x256xf32>
    %59 = arith.addf %56, %58 : vector<32x256xf32>
    %cst_28 = arith.constant 0.000000e+00 : f32
    %60 = vector.broadcast %cst_28 : f32 to vector<32x256xf32>
    %61 = arith.maximumf %59, %60 : vector<32x256xf32>
    %62 = arith.addf %21, %61 : vector<32x256xf32>
    %c0_29 = arith.constant 0 : index
    %c0_30 = arith.constant 0 : index
    %63 = vector.load %arg9[%c0_29, %c0_30] : memref<24x32xf32, #tpu.memory_space<vmem>>, vector<24x32xf32>
    %cst_31 = arith.constant dense<0.000000e+00> : vector<24x256xf32>
    %64 = tpu.matmul %63, %62, %cst_31 {dimension_numbers = #tpu.dot_dimension_numbers<[1], [0], [0], [1], [0, 0, 1, 1], [], []>} : vector<24x32xf32>, vector<32x256xf32>, vector<24x256xf32> -> vector<24x256xf32>
    %c0_32 = arith.constant 0 : index
    %c0_33 = arith.constant 0 : index
    %65 = vector.load %arg10[%c0_32, %c0_33] : memref<24x1xf32, #tpu.memory_space<vmem>>, vector<24x1xf32>
    %66 = vector.broadcast %65 : vector<24x1xf32> to vector<24x256xf32>
    %67 = arith.addf %64, %66 : vector<24x256xf32>
    %68 = arith.negf %67 : vector<24x256xf32>
    %69 = math.exp %68 : vector<24x256xf32>
    %cst_34 = arith.constant 1.000000e+00 : f32
    %70 = vector.broadcast %cst_34 : f32 to vector<24x256xf32>
    %71 = arith.addf %70, %69 : vector<24x256xf32>
    %72 = arith.divf %70, %71 : vector<24x256xf32>
    %73 = vector.extract_strided_slice %62 {offsets = [0, 0], sizes = [24, 256], strides = [1, 1]} : vector<32x256xf32> to vector<24x256xf32>
    %74 = arith.mulf %73, %72 : vector<24x256xf32>
    %75 = vector.extract_strided_slice %21 {offsets = [24, 0], sizes = [8, 256], strides = [1, 1]} : vector<32x256xf32> to vector<8x256xf32>
    %76 = vector.extract_strided_slice %74 {offsets = [0, 0], sizes = [8, 256], strides = [1, 1]} : vector<24x256xf32> to vector<8x256xf32>
    %77 = arith.addf %75, %76 : vector<8x256xf32>
    %78 = vector.extract_strided_slice %74 {offsets = [8, 0], sizes = [8, 256], strides = [1, 1]} : vector<24x256xf32> to vector<8x256xf32>
    %79 = arith.addf %77, %78 : vector<8x256xf32>
    %80 = vector.extract_strided_slice %74 {offsets = [16, 0], sizes = [8, 256], strides = [1, 1]} : vector<24x256xf32> to vector<8x256xf32>
    %81 = arith.addf %79, %80 : vector<8x256xf32>
    %c255_i32_35 = arith.constant 255 : i32
    %82 = tpu.dynamic_rotate %81 by %c255_i32_35 dim 1 : vector<8x256xf32>, i32 -> vector<8x256xf32>
    %83 = arith.maximumf %81, %82 : vector<8x256xf32>
    %c1_i32_36 = arith.constant 1 : i32
    %84 = tpu.dynamic_rotate %83 by %c1_i32_36 dim 1 : vector<8x256xf32>, i32 -> vector<8x256xf32>
    %85 = vector.shape_cast %3 : vector<1x256xi1> to vector<1x256xi1>
    %86 = vector.broadcast %85 : vector<1x256xi1> to vector<8x256xi1>
    %87 = arith.select %86, %83, %84 : vector<8x256xi1>, vector<8x256xf32>
    %c240_i32_37 = arith.constant 240 : i32
    %88 = tpu.dynamic_rotate %87 by %c240_i32_37 dim 1 : vector<8x256xf32>, i32 -> vector<8x256xf32>
    %89 = arith.maximumf %87, %88 : vector<8x256xf32>
    %c16_i32_38 = arith.constant 16 : i32
    %90 = tpu.dynamic_rotate %89 by %c16_i32_38 dim 1 : vector<8x256xf32>, i32 -> vector<8x256xf32>
    %91 = vector.shape_cast %6 : vector<1x256xi1> to vector<1x256xi1>
    %92 = vector.broadcast %91 : vector<1x256xi1> to vector<8x256xi1>
    %93 = arith.select %92, %89, %90 : vector<8x256xi1>, vector<8x256xf32>
    %c254_i32_39 = arith.constant 254 : i32
    %94 = tpu.dynamic_rotate %93 by %c254_i32_39 dim 1 : vector<8x256xf32>, i32 -> vector<8x256xf32>
    %95 = arith.maximumf %93, %94 : vector<8x256xf32>
    %c2_i32_40 = arith.constant 2 : i32
    %96 = tpu.dynamic_rotate %95 by %c2_i32_40 dim 1 : vector<8x256xf32>, i32 -> vector<8x256xf32>
    %97 = vector.shape_cast %9 : vector<1x256xi1> to vector<1x256xi1>
    %98 = vector.broadcast %97 : vector<1x256xi1> to vector<8x256xi1>
    %99 = arith.select %98, %95, %96 : vector<8x256xi1>, vector<8x256xf32>
    %c224_i32_41 = arith.constant 224 : i32
    %100 = tpu.dynamic_rotate %99 by %c224_i32_41 dim 1 : vector<8x256xf32>, i32 -> vector<8x256xf32>
    %101 = arith.maximumf %99, %100 : vector<8x256xf32>
    %c32_i32_42 = arith.constant 32 : i32
    %102 = tpu.dynamic_rotate %101 by %c32_i32_42 dim 1 : vector<8x256xf32>, i32 -> vector<8x256xf32>
    %103 = vector.shape_cast %12 : vector<1x256xi1> to vector<1x256xi1>
    %104 = vector.broadcast %103 : vector<1x256xi1> to vector<8x256xi1>
    %105 = arith.select %104, %101, %102 : vector<8x256xi1>, vector<8x256xf32>
    %c0_43 = arith.constant 0 : index
    %c0_44 = arith.constant 0 : index
    %c0_45 = arith.constant 0 : index
    %106 = vector.load %arg11[%c0_43, %c0_44, %c0_45] : memref<3x8x8xf32, #tpu.memory_space<vmem>>, vector<1x8x8xf32>
    %107 = vector.shape_cast %106 : vector<1x8x8xf32> to vector<8x8xf32>
    %cst_46 = arith.constant dense<0.000000e+00> : vector<8x256xf32>
    %108 = tpu.matmul %107, %81, %cst_46 {dimension_numbers = #tpu.dot_dimension_numbers<[1], [0], [0], [1], [0, 0, 1, 1], [], []>} : vector<8x8xf32>, vector<8x256xf32>, vector<8x256xf32> -> vector<8x256xf32>
    %c1_47 = arith.constant 1 : index
    %c0_48 = arith.constant 0 : index
    %c0_49 = arith.constant 0 : index
    %109 = vector.load %arg11[%c1_47, %c0_48, %c0_49] : memref<3x8x8xf32, #tpu.memory_space<vmem>>, vector<1x8x8xf32>
    %110 = vector.shape_cast %109 : vector<1x8x8xf32> to vector<8x8xf32>
    %cst_50 = arith.constant dense<0.000000e+00> : vector<8x256xf32>
    %111 = tpu.matmul %110, %93, %cst_50 {dimension_numbers = #tpu.dot_dimension_numbers<[1], [0], [0], [1], [0, 0, 1, 1], [], []>} : vector<8x8xf32>, vector<8x256xf32>, vector<8x256xf32> -> vector<8x256xf32>
    %112 = arith.addf %108, %111 : vector<8x256xf32>
    %c2_51 = arith.constant 2 : index
    %c0_52 = arith.constant 0 : index
    %c0_53 = arith.constant 0 : index
    %113 = vector.load %arg11[%c2_51, %c0_52, %c0_53] : memref<3x8x8xf32, #tpu.memory_space<vmem>>, vector<1x8x8xf32>
    %114 = vector.shape_cast %113 : vector<1x8x8xf32> to vector<8x8xf32>
    %cst_54 = arith.constant dense<0.000000e+00> : vector<8x256xf32>
    %115 = tpu.matmul %114, %105, %cst_54 {dimension_numbers = #tpu.dot_dimension_numbers<[1], [0], [0], [1], [0, 0, 1, 1], [], []>} : vector<8x8xf32>, vector<8x256xf32>, vector<8x256xf32> -> vector<8x256xf32>
    %116 = arith.addf %112, %115 : vector<8x256xf32>
    %c0_55 = arith.constant 0 : index
    %c0_56 = arith.constant 0 : index
    %117 = vector.load %arg12[%c0_55, %c0_56] : memref<8x1xf32, #tpu.memory_space<vmem>>, vector<8x1xf32>
    %118 = vector.broadcast %117 : vector<8x1xf32> to vector<8x256xf32>
    %119 = arith.addf %116, %118 : vector<8x256xf32>
    %cst_57 = arith.constant 0.000000e+00 : f32
    %120 = vector.broadcast %cst_57 : f32 to vector<8x256xf32>
    %121 = arith.maximumf %119, %120 : vector<8x256xf32>
    %122 = arith.addf %81, %121 : vector<8x256xf32>
    %c0_58 = arith.constant 0 : index
    %c0_59 = arith.constant 0 : index
    %123 = vector.load %arg13[%c0_58, %c0_59] : memref<24x8xf32, #tpu.memory_space<vmem>>, vector<24x8xf32>
    %cst_60 = arith.constant dense<0.000000e+00> : vector<24x256xf32>
    %124 = tpu.matmul %123, %122, %cst_60 {dimension_numbers = #tpu.dot_dimension_numbers<[1], [0], [0], [1], [0, 0, 1, 1], [], []>} : vector<24x8xf32>, vector<8x256xf32>, vector<24x256xf32> -> vector<24x256xf32>
    %c0_61 = arith.constant 0 : index
    %c0_62 = arith.constant 0 : index
    %125 = vector.load %arg14[%c0_61, %c0_62] : memref<24x24xf32, #tpu.memory_space<vmem>>, vector<24x24xf32>
    %126 = vector.extract_strided_slice %62 {offsets = [0, 0], sizes = [24, 256], strides = [1, 1]} : vector<32x256xf32> to vector<24x256xf32>
    %cst_63 = arith.constant dense<0.000000e+00> : vector<24x256xf32>
    %127 = tpu.matmul %125, %126, %cst_63 {dimension_numbers = #tpu.dot_dimension_numbers<[1], [0], [0], [1], [0, 0, 1, 1], [], []>} : vector<24x24xf32>, vector<24x256xf32>, vector<24x256xf32> -> vector<24x256xf32>
    %128 = arith.addf %124, %127 : vector<24x256xf32>
    %c0_64 = arith.constant 0 : index
    %c0_65 = arith.constant 0 : index
    %129 = vector.load %arg15[%c0_64, %c0_65] : memref<24x1xf32, #tpu.memory_space<vmem>>, vector<24x1xf32>
    %130 = vector.broadcast %129 : vector<24x1xf32> to vector<24x256xf32>
    %131 = arith.addf %128, %130 : vector<24x256xf32>
    %132 = arith.negf %131 : vector<24x256xf32>
    %133 = math.exp %132 : vector<24x256xf32>
    %cst_66 = arith.constant 1.000000e+00 : f32
    %134 = vector.broadcast %cst_66 : f32 to vector<24x256xf32>
    %135 = arith.addf %134, %133 : vector<24x256xf32>
    %136 = arith.divf %134, %135 : vector<24x256xf32>
    %137 = vector.extract_strided_slice %21 {offsets = [0, 0], sizes = [8, 256], strides = [1, 1]} : vector<32x256xf32> to vector<8x256xf32>
    %138 = vector.extract_strided_slice %136 {offsets = [0, 0], sizes = [8, 256], strides = [1, 1]} : vector<24x256xf32> to vector<8x256xf32>
    %139 = arith.mulf %122, %138 : vector<8x256xf32>
    %140 = arith.addf %137, %139 : vector<8x256xf32>
    %c0_67 = arith.constant 0 : index
    %c0_68 = arith.constant 0 : index
    %c0_69 = arith.constant 0 : index
    %141 = vector.load %arg16[%c0_67, %c0_68, %c0_69] : memref<1x8x256xf32, #tpu.memory_space<vmem>>, vector<1x8x256xf32>
    %142 = vector.shape_cast %141 : vector<1x8x256xf32> to vector<8x256xf32>
    %143 = vector.shape_cast %140 : vector<8x256xf32> to vector<1x8x256xf32>
    tpu.vector_store %arg16[%c0_67, %c0_68, %c0_69], %143 {strides = array<i32>} : memref<1x8x256xf32, #tpu.memory_space<vmem>>, vector<1x8x256xf32>,
    %144 = vector.extract_strided_slice %21 {offsets = [8, 0], sizes = [8, 256], strides = [1, 1]} : vector<32x256xf32> to vector<8x256xf32>
    %145 = vector.extract_strided_slice %136 {offsets = [8, 0], sizes = [8, 256], strides = [1, 1]} : vector<24x256xf32> to vector<8x256xf32>
    %146 = arith.mulf %122, %145 : vector<8x256xf32>
    %147 = arith.addf %144, %146 : vector<8x256xf32>
    %c0_70 = arith.constant 0 : index
    %c0_71 = arith.constant 0 : index
    %c0_72 = arith.constant 0 : index
    %148 = vector.load %arg17[%c0_70, %c0_71, %c0_72] : memref<1x8x256xf32, #tpu.memory_space<vmem>>, vector<1x8x256xf32>
    %149 = vector.shape_cast %148 : vector<1x8x256xf32> to vector<8x256xf32>
    %150 = vector.shape_cast %147 : vector<8x256xf32> to vector<1x8x256xf32>
    tpu.vector_store %arg17[%c0_70, %c0_71, %c0_72], %150 {strides = array<i32>} : memref<1x8x256xf32, #tpu.memory_space<vmem>>, vector<1x8x256xf32>,
    %151 = vector.extract_strided_slice %21 {offsets = [16, 0], sizes = [8, 256], strides = [1, 1]} : vector<32x256xf32> to vector<8x256xf32>
    %152 = vector.extract_strided_slice %136 {offsets = [16, 0], sizes = [8, 256], strides = [1, 1]} : vector<24x256xf32> to vector<8x256xf32>
    %153 = arith.mulf %122, %152 : vector<8x256xf32>
    %154 = arith.addf %151, %153 : vector<8x256xf32>
    %c0_73 = arith.constant 0 : index
    %c0_74 = arith.constant 0 : index
    %c0_75 = arith.constant 0 : index
    %155 = vector.load %arg18[%c0_73, %c0_74, %c0_75] : memref<1x8x256xf32, #tpu.memory_space<vmem>>, vector<1x8x256xf32>
    %156 = vector.shape_cast %155 : vector<1x8x256xf32> to vector<8x256xf32>
    %157 = vector.shape_cast %154 : vector<8x256xf32> to vector<1x8x256xf32>
    tpu.vector_store %arg18[%c0_73, %c0_74, %c0_75], %157 {strides = array<i32>} : memref<1x8x256xf32, #tpu.memory_space<vmem>>, vector<1x8x256xf32>,
    %c0_76 = arith.constant 0 : index
    %c0_77 = arith.constant 0 : index
    %c0_78 = arith.constant 0 : index
    %158 = vector.load %arg19[%c0_76, %c0_77, %c0_78] : memref<1x8x256xf32, #tpu.memory_space<vmem>>, vector<1x8x256xf32>
    %159 = vector.shape_cast %158 : vector<1x8x256xf32> to vector<8x256xf32>
    %160 = vector.shape_cast %81 : vector<8x256xf32> to vector<1x8x256xf32>
    tpu.vector_store %arg19[%c0_76, %c0_77, %c0_78], %160 {strides = array<i32>} : memref<1x8x256xf32, #tpu.memory_space<vmem>>, vector<1x8x256xf32>,
    return
  }
  func.func @transform_0(%arg0: i32, %arg1: i32) -> (i32, i32, i32) {
    %c0_i32 = arith.constant 0 : i32
    %c0_i32_0 = arith.constant 0 : i32
    return %arg0, %c0_i32, %arg1 : i32, i32, i32
  }
  func.func @transform_1(%arg0: i32, %arg1: i32) -> (i32, i32, i32) {
    %c0_i32 = arith.constant 0 : i32
    %c0_i32_0 = arith.constant 0 : i32
    return %arg0, %c0_i32, %arg1 : i32, i32, i32
  }
  func.func @transform_2(%arg0: i32, %arg1: i32) -> (i32, i32, i32) {
    %c0_i32 = arith.constant 0 : i32
    %c0_i32_0 = arith.constant 0 : i32
    return %arg0, %c0_i32, %arg1 : i32, i32, i32
  }
  func.func @transform_3(%arg0: i32, %arg1: i32) -> (i32, i32, i32) {
    %c0_i32 = arith.constant 0 : i32
    %c0_i32_0 = arith.constant 0 : i32
    return %arg0, %c0_i32, %arg1 : i32, i32, i32
  }
  func.func @transform_4(%arg0: i32, %arg1: i32) -> (i32, i32) {
    %c0_i32 = arith.constant 0 : i32
    %c0_i32_0 = arith.constant 0 : i32
    %c0_i32_1 = arith.constant 0 : i32
    return %c0_i32, %c0_i32_0 : i32, i32
  }
  func.func @transform_5(%arg0: i32, %arg1: i32) -> (i32, i32, i32) {
    %c0_i32 = arith.constant 0 : i32
    %c0_i32_0 = arith.constant 0 : i32
    %c0_i32_1 = arith.constant 0 : i32
    %c0_i32_2 = arith.constant 0 : i32
    return %c0_i32, %c0_i32_0, %c0_i32_1 : i32, i32, i32
  }
  func.func @transform_6(%arg0: i32, %arg1: i32) -> (i32, i32) {
    %c0_i32 = arith.constant 0 : i32
    %c0_i32_0 = arith.constant 0 : i32
    %c0_i32_1 = arith.constant 0 : i32
    return %c0_i32, %c0_i32_0 : i32, i32
  }
  func.func @transform_7(%arg0: i32, %arg1: i32) -> (i32, i32) {
    %c0_i32 = arith.constant 0 : i32
    %c0_i32_0 = arith.constant 0 : i32
    %c0_i32_1 = arith.constant 0 : i32
    return %c0_i32, %c0_i32_0 : i32, i32
  }
  func.func @transform_8(%arg0: i32, %arg1: i32) -> (i32, i32) {
    %c0_i32 = arith.constant 0 : i32
    %c0_i32_0 = arith.constant 0 : i32
    %c0_i32_1 = arith.constant 0 : i32
    return %c0_i32, %c0_i32_0 : i32, i32
  }
  func.func @transform_9(%arg0: i32, %arg1: i32) -> (i32, i32, i32) {
    %c0_i32 = arith.constant 0 : i32
    %c0_i32_0 = arith.constant 0 : i32
    %c0_i32_1 = arith.constant 0 : i32
    %c0_i32_2 = arith.constant 0 : i32
    return %c0_i32, %c0_i32_0, %c0_i32_1 : i32, i32, i32
  }
  func.func @transform_10(%arg0: i32, %arg1: i32) -> (i32, i32) {
    %c0_i32 = arith.constant 0 : i32
    %c0_i32_0 = arith.constant 0 : i32
    %c0_i32_1 = arith.constant 0 : i32
    return %c0_i32, %c0_i32_0 : i32, i32
  }
  func.func @transform_11(%arg0: i32, %arg1: i32) -> (i32, i32) {
    %c0_i32 = arith.constant 0 : i32
    %c0_i32_0 = arith.constant 0 : i32
    %c0_i32_1 = arith.constant 0 : i32
    return %c0_i32, %c0_i32_0 : i32, i32
  }
  func.func @transform_12(%arg0: i32, %arg1: i32) -> (i32, i32) {
    %c0_i32 = arith.constant 0 : i32
    %c0_i32_0 = arith.constant 0 : i32
    %c0_i32_1 = arith.constant 0 : i32
    return %c0_i32, %c0_i32_0 : i32, i32
  }
  func.func @transform_13(%arg0: i32, %arg1: i32) -> (i32, i32) {
    %c0_i32 = arith.constant 0 : i32
    %c0_i32_0 = arith.constant 0 : i32
    %c0_i32_1 = arith.constant 0 : i32
    return %c0_i32, %c0_i32_0 : i32, i32
  }
  func.func @transform_14(%arg0: i32, %arg1: i32) -> (i32, i32, i32) {
    %c0_i32 = arith.constant 0 : i32
    %c0_i32_0 = arith.constant 0 : i32
    return %arg0, %c0_i32, %arg1 : i32, i32, i32
  }
  func.func @transform_15(%arg0: i32, %arg1: i32) -> (i32, i32, i32) {
    %c0_i32 = arith.constant 0 : i32
    %c0_i32_0 = arith.constant 0 : i32
    return %arg0, %c0_i32, %arg1 : i32, i32, i32
  }
  func.func @transform_16(%arg0: i32, %arg1: i32) -> (i32, i32, i32) {
    %c0_i32 = arith.constant 0 : i32
    %c0_i32_0 = arith.constant 0 : i32
    return %arg0, %c0_i32, %arg1 : i32, i32, i32
  }
  func.func @transform_17(%arg0: i32, %arg1: i32) -> (i32, i32, i32) {
    %c0_i32 = arith.constant 0 : i32
    %c0_i32_0 = arith.constant 0 : i32
    return %arg0, %c0_i32, %arg1 : i32, i32, i32
  }
}

</mosaic_0001>

<llo_original>
// kernel: block_rgbt_2to1_forward.1
$region0: #{block_rgbt_2to1_forward.1}
  #allocation0 [shape = 'u32[]', space=smem, size = 0x4, offset = 0x4, fixed_abs, tag = 'smem constant byte address 0x4 - core index']
  #allocation1 [shape = 'u32[144,128]{1,0:T(1,128)}', space=vmem, size = 0x12000, scoped, tag = 'internal scratch']
  %s0 = inlined_call_operand.vmem [shape: f32[2,8,256], index: 0, kind: input, shape index: {}]
  %s1 = inlined_call_operand.vmem [shape: f32[2,8,256], index: 1, kind: input, shape index: {}]
  %s2 = inlined_call_operand.vmem [shape: f32[2,8,256], index: 2, kind: input, shape index: {}]
  %s3 = inlined_call_operand.vmem [shape: f32[2,8,256], index: 3, kind: input, shape index: {}]
  %s4 = inlined_call_operand.vmem [shape: f32[4,256], index: 4, kind: input, shape index: {}]
  %s5 = inlined_call_operand.vmem [shape: f32[3,32,32], index: 5, kind: input, shape index: {}]
  %s6 = inlined_call_operand.vmem [shape: f32[32,1], index: 6, kind: input, shape index: {}]
  %s7 = inlined_call_operand.vmem [shape: f32[24,32], index: 7, kind: input, shape index: {}]
  %s8 = inlined_call_operand.vmem [shape: f32[24,1], index: 8, kind: input, shape index: {}]
  %s9 = inlined_call_operand.vmem [shape: f32[3,8,8], index: 9, kind: input, shape index: {}]
  %s10 = inlined_call_operand.vmem [shape: f32[8,1], index: 10, kind: input, shape index: {}]
  %s11 = inlined_call_operand.vmem [shape: f32[24,8], index: 11, kind: input, shape index: {}]
  %s12 = inlined_call_operand.vmem [shape: f32[24,24], index: 12, kind: input, shape index: {}]
  %s13 = inlined_call_operand.vmem [shape: f32[24,1], index: 13, kind: input, shape index: {}]
  %s14 = inlined_call_operand.vmem [shape: f32[2,8,256], index: 14, kind: output, shape index: {0}]
  %s15 = inlined_call_operand.vmem [shape: f32[2,8,256], index: 15, kind: output, shape index: {1}]
  %s16 = inlined_call_operand.vmem [shape: f32[2,8,256], index: 16, kind: output, shape index: {2}]
  %s17 = inlined_call_operand.vmem [shape: f32[2,8,256], index: 17, kind: output, shape index: {3}]
  %18 = xla_tuple %s14, %s15, %s16, %s17
  %s19 = sld [smem:[#allocation0]]
  $region113: #{block_rgbt_2to1_forward.1} parent=0
    _
  %s21 = ssub.s32 1, %s19
  %s22 = scalar_select 0, %s21, %s19
  loop: start=0, step=1, limit=4
  $region2: #{block_rgbt_2to1_forward.1} parent=0 // loop_pre_header
    _
  $region3: #{block_rgbt_2to1_forward.1} parent=0 // loop_header
    %s24 = sphi 0, %s28
    %p25 = scmp.ge.s32.totalorder %s24, 4
    %s31 = sphi 0, %s43
    %s32 = sphi 0, %s39
    %s33 = sphi 0, %s31
    %s34 = sphi 0, %s32
    %s35 = sphi 0, %s33
    %s36 = sphi 0, %s34
    %s48 = sphi 0, %s50
    %s51 = sphi 0, %s48
    %s52 = sphi 0, %s51
    %s68 = sphi 0, %s52
    %s76 = sphi 0, %s78
    %s79 = sphi 0, %s76
    %s80 = sphi 0, %s79
    %s96 = sphi 0, %s80
    %s104 = sphi 0, %s106
    %s107 = sphi 0, %s104
    %s108 = sphi 0, %s107
    %s124 = sphi 0, %s108
    %s132 = sphi 0, %s134
    %s135 = sphi 0, %s132
    %s136 = sphi 0, %s135
    %s152 = sphi 0, %s136
    %s156 = sphi 0, %s156
    %s158 = sphi 0, %s156
    %s159 = sphi 0, %s158
    %s173 = sphi 0, %s159
    %s177 = sphi 0, %s177
    %s179 = sphi 0, %s177
    %s180 = sphi 0, %s179
    %s194 = sphi 0, %s180
    %s198 = sphi 0, %s198
    %s200 = sphi 0, %s198
    %s201 = sphi 0, %s200
    %s215 = sphi 0, %s201
    %s219 = sphi 0, %s219
    %s221 = sphi 0, %s219
    %s222 = sphi 0, %s221
    %s236 = sphi 0, %s222
    %s240 = sphi 0, %s240
    %s242 = sphi 0, %s240
    %s243 = sphi 0, %s242
    %s257 = sphi 0, %s243
    %s261 = sphi 0, %s261
    %s263 = sphi 0, %s261
    %s264 = sphi 0, %s263
    %s278 = sphi 0, %s264
    %s282 = sphi 0, %s282
    %s284 = sphi 0, %s282
    %s285 = sphi 0, %s284
    %s299 = sphi 0, %s285
    %s303 = sphi 0, %s303
    %s305 = sphi 0, %s303
    %s306 = sphi 0, %s305
    %s320 = sphi 0, %s306
    %s324 = sphi 0, %s324
    %s326 = sphi 0, %s324
    %s327 = sphi 0, %s326
    %s341 = sphi 0, %s327
    %s345 = sphi 0, %s345
    %s347 = sphi 0, %s345
    %s348 = sphi 0, %s347
    %s362 = sphi 0, %s348
    %s370 = sphi 0, %s372
    %s373 = sphi 0, %s370
    %s374 = sphi 0, %s373
    %s390 = sphi 0, %s374
    %s398 = sphi 0, %s400
    %s401 = sphi 0, %s398
    %s402 = sphi 0, %s401
    %s418 = sphi 0, %s402
    %s426 = sphi 0, %s428
    %s429 = sphi 0, %s426
    %s430 = sphi 0, %s429
    %s446 = sphi 0, %s430
    %s454 = sphi 0, %s456
    %s457 = sphi 0, %s454
    %s458 = sphi 0, %s457
    %s474 = sphi 0, %s458
  $region4: #{block_rgbt_2to1_forward.1} parent=0 // loop_header_branch
    %27 = sbr.rel (%p25) target = $region8
  $region5: #{block_rgbt_2to1_forward.1} parent=0 // loop_body
    %s29 = ssub.s32 %s24, 1
    %s30 = ssub.s32 %s24, 2
    %s37 = sadd.s32 1, %s32
    %p38 = scmp.ge.s32.totalorder %s37, 1
    %s39 = scalar_select %p38, 0, %s37
    %s40 = sadd.s32 1, %s31
    %s41 = scalar_select %p38, %s40, %s31
    %p42 = scmp.ge.s32.totalorder %s41, 2
    %s43 = scalar_select %p42, 0, %s41
    %s44 = ssub.s32 %s31, %s43
    %s45 = ssub.s32 %s32, %s39
    %s46 = sor.u32 %s44, %s45
    %p47 = scmp.eq.s32.totalorder %s46, 0
    %s49 = sadd.s32 %s48, 1
    %s50 = scalar_select %p47, %s48, %s49
    %p53 = pneg %p47
    %p54 = scmp.eq.s32.totalorder %s24, 1
    %p55 = por %p53, %p54
    %p56 = scmp.ne.s32.totalorder %s48, %s51
    %p57 = scmp.eq.s32.totalorder %s24, 0
    %p58 = por %p56, %p57
    %p59 = scmp.ne.s32.totalorder %s48, %s51
    %p60 = scmp.eq.s32.totalorder %s29, 1
    %p61 = por %p59, %p60
    %p62 = scmp.ne.s32.totalorder %s51, %s52
    %p63 = scmp.eq.s32.totalorder %s29, 0
    %p64 = por %p62, %p63
    %p65 = scmp.ne.s32.totalorder %s51, %s52
    %p66 = scmp.eq.s32.totalorder %s30, 1
    %p67 = por %p65, %p66
    %p69 = scmp.ne.s32.totalorder %s52, %s68
    %p70 = scmp.eq.s32.totalorder %s30, 0
    %p71 = por %p69, %p70
    %s72 = ssub.s32 %s31, %s43
    %s73 = ssub.s32 %s32, %s39
    %s74 = sor.u32 %s72, %s73
    %p75 = scmp.eq.s32.totalorder %s74, 0
    %s77 = sadd.s32 %s76, 1
    %s78 = scalar_select %p75, %s76, %s77
    %p81 = pneg %p75
    %p82 = scmp.eq.s32.totalorder %s24, 1
    %p83 = por %p81, %p82
    %p84 = scmp.ne.s32.totalorder %s76, %s79
    %p85 = scmp.eq.s32.totalorder %s24, 0
    %p86 = por %p84, %p85
    %p87 = scmp.ne.s32.totalorder %s76, %s79
    %p88 = scmp.eq.s32.totalorder %s29, 1
    %p89 = por %p87, %p88
    %p90 = scmp.ne.s32.totalorder %s79, %s80
    %p91 = scmp.eq.s32.totalorder %s29, 0
    %p92 = por %p90, %p91
    %p93 = scmp.ne.s32.totalorder %s79, %s80
    %p94 = scmp.eq.s32.totalorder %s30, 1
    %p95 = por %p93, %p94
    %p97 = scmp.ne.s32.totalorder %s80, %s96
    %p98 = scmp.eq.s32.totalorder %s30, 0
    %p99 = por %p97, %p98
    %s100 = ssub.s32 %s31, %s43
    %s101 = ssub.s32 %s32, %s39
    %s102 = sor.u32 %s100, %s101
    %p103 = scmp.eq.s32.totalorder %s102, 0
    %s105 = sadd.s32 %s104, 1
    %s106 = scalar_select %p103, %s104, %s105
    %p109 = pneg %p103
    %p110 = scmp.eq.s32.totalorder %s24, 1
    %p111 = por %p109, %p110
    %p112 = scmp.ne.s32.totalorder %s104, %s107
    %p113 = scmp.eq.s32.totalorder %s24, 0
    %p114 = por %p112, %p113
    %p115 = scmp.ne.s32.totalorder %s104, %s107
    %p116 = scmp.eq.s32.totalorder %s29, 1
    %p117 = por %p115, %p116
    %p118 = scmp.ne.s32.totalorder %s107, %s108
    %p119 = scmp.eq.s32.totalorder %s29, 0
    %p120 = por %p118, %p119
    %p121 = scmp.ne.s32.totalorder %s107, %s108
    %p122 = scmp.eq.s32.totalorder %s30, 1
    %p123 = por %p121, %p122
    %p125 = scmp.ne.s32.totalorder %s108, %s124
    %p126 = scmp.eq.s32.totalorder %s30, 0
    %p127 = por %p125, %p126
    %s128 = ssub.s32 %s31, %s43
    %s129 = ssub.s32 %s32, %s39
    %s130 = sor.u32 %s128, %s129
    %p131 = scmp.eq.s32.totalorder %s130, 0
    %s133 = sadd.s32 %s132, 1
    %s134 = scalar_select %p131, %s132, %s133
    %p137 = pneg %p131
    %p138 = scmp.eq.s32.totalorder %s24, 1
    %p139 = por %p137, %p138
    %p140 = scmp.ne.s32.totalorder %s132, %s135
    %p141 = scmp.eq.s32.totalorder %s24, 0
    %p142 = por %p140, %p141
    %p143 = scmp.ne.s32.totalorder %s132, %s135
    %p144 = scmp.eq.s32.totalorder %s29, 1
    %p145 = por %p143, %p144
    %p146 = scmp.ne.s32.totalorder %s135, %s136
    %p147 = scmp.eq.s32.totalorder %s29, 0
    %p148 = por %p146, %p147
    %p149 = scmp.ne.s32.totalorder %s135, %s136
    %p150 = scmp.eq.s32.totalorder %s30, 1
    %p151 = por %p149, %p150
    %p153 = scmp.ne.s32.totalorder %s136, %s152
    %p154 = scmp.eq.s32.totalorder %s30, 0
    %p155 = por %p153, %p154
    %s157 = sadd.s32 %s156, 1
    %p160 = scmp.eq.s32.totalorder %s24, 1
    %p161 = scmp.ne.s32.totalorder %s156, %s158
    %p162 = scmp.eq.s32.totalorder %s24, 0
    %p163 = por %p161, %p162
    %p164 = scmp.ne.s32.totalorder %s156, %s158
    %p165 = scmp.eq.s32.totalorder %s29, 1
    %p166 = por %p164, %p165
    %p167 = scmp.ne.s32.totalorder %s158, %s159
    %p168 = scmp.eq.s32.totalorder %s29, 0
    %p169 = por %p167, %p168
    %p170 = scmp.ne.s32.totalorder %s158, %s159
    %p171 = scmp.eq.s32.totalorder %s30, 1
    %p172 = por %p170, %p171
    %p174 = scmp.ne.s32.totalorder %s159, %s173
    %p175 = scmp.eq.s32.totalorder %s30, 0
    %p176 = por %p174, %p175
    %s178 = sadd.s32 %s177, 1
    %p181 = scmp.eq.s32.totalorder %s24, 1
    %p182 = scmp.ne.s32.totalorder %s177, %s179
    %p183 = scmp.eq.s32.totalorder %s24, 0
    %p184 = por %p182, %p183
    %p185 = scmp.ne.s32.totalorder %s177, %s179
    %p186 = scmp.eq.s32.totalorder %s29, 1
    %p187 = por %p185, %p186
    %p188 = scmp.ne.s32.totalorder %s179, %s180
    %p189 = scmp.eq.s32.totalorder %s29, 0
    %p190 = por %p188, %p189
    %p191 = scmp.ne.s32.totalorder %s179, %s180
    %p192 = scmp.eq.s32.totalorder %s30, 1
    %p193 = por %p191, %p192
    %p195 = scmp.ne.s32.totalorder %s180, %s194
    %p196 = scmp.eq.s32.totalorder %s30, 0
    %p197 = por %p195, %p196
    %s199 = sadd.s32 %s198, 1
    %p202 = scmp.eq.s32.totalorder %s24, 1
    %p203 = scmp.ne.s32.totalorder %s198, %s200
    %p204 = scmp.eq.s32.totalorder %s24, 0
    %p205 = por %p203, %p204
    %p206 = scmp.ne.s32.totalorder %s198, %s200
    %p207 = scmp.eq.s32.totalorder %s29, 1
    %p208 = por %p206, %p207
    %p209 = scmp.ne.s32.totalorder %s200, %s201
    %p210 = scmp.eq.s32.totalorder %s29, 0
    %p211 = por %p209, %p210
    %p212 = scmp.ne.s32.totalorder %s200, %s201
    %p213 = scmp.eq.s32.totalorder %s30, 1
    %p214 = por %p212, %p213
    %p216 = scmp.ne.s32.totalorder %s201, %s215
    %p217 = scmp.eq.s32.totalorder %s30, 0
    %p218 = por %p216, %p217
    %s220 = sadd.s32 %s219, 1
    %p223 = scmp.eq.s32.totalorder %s24, 1
    %p224 = scmp.ne.s32.totalorder %s219, %s221
    %p225 = scmp.eq.s32.totalorder %s24, 0
    %p226 = por %p224, %p225
    %p227 = scmp.ne.s32.totalorder %s219, %s221
    %p228 = scmp.eq.s32.totalorder %s29, 1
    %p229 = por %p227, %p228
    %p230 = scmp.ne.s32.totalorder %s221, %s222
    %p231 = scmp.eq.s32.totalorder %s29, 0
    %p232 = por %p230, %p231
    %p233 = scmp.ne.s32.totalorder %s221, %s222
    %p234 = scmp.eq.s32.totalorder %s30, 1
    %p235 = por %p233, %p234
    %p237 = scmp.ne.s32.totalorder %s222, %s236
    %p238 = scmp.eq.s32.totalorder %s30, 0
    %p239 = por %p237, %p238
    %s241 = sadd.s32 %s240, 1
    %p244 = scmp.eq.s32.totalorder %s24, 1
    %p245 = scmp.ne.s32.totalorder %s240, %s242
    %p246 = scmp.eq.s32.totalorder %s24, 0
    %p247 = por %p245, %p246
    %p248 = scmp.ne.s32.totalorder %s240, %s242
    %p249 = scmp.eq.s32.totalorder %s29, 1
    %p250 = por %p248, %p249
    %p251 = scmp.ne.s32.totalorder %s242, %s243
    %p252 = scmp.eq.s32.totalorder %s29, 0
    %p253 = por %p251, %p252
    %p254 = scmp.ne.s32.totalorder %s242, %s243
    %p255 = scmp.eq.s32.totalorder %s30, 1
    %p256 = por %p254, %p255
    %p258 = scmp.ne.s32.totalorder %s243, %s257
    %p259 = scmp.eq.s32.totalorder %s30, 0
    %p260 = por %p258, %p259
    %s262 = sadd.s32 %s261, 1
    %p265 = scmp.eq.s32.totalorder %s24, 1
    %p266 = scmp.ne.s32.totalorder %s261, %s263
    %p267 = scmp.eq.s32.totalorder %s24, 0
    %p268 = por %p266, %p267
    %p269 = scmp.ne.s32.totalorder %s261, %s263
    %p270 = scmp.eq.s32.totalorder %s29, 1
    %p271 = por %p269, %p270
    %p272 = scmp.ne.s32.totalorder %s263, %s264
    %p273 = scmp.eq.s32.totalorder %s29, 0
    %p274 = por %p272, %p273
    %p275 = scmp.ne.s32.totalorder %s263, %s264
    %p276 = scmp.eq.s32.totalorder %s30, 1
    %p277 = por %p275, %p276
    %p279 = scmp.ne.s32.totalorder %s264, %s278
    %p280 = scmp.eq.s32.totalorder %s30, 0
    %p281 = por %p279, %p280
    %s283 = sadd.s32 %s282, 1
    %p286 = scmp.eq.s32.totalorder %s24, 1
    %p287 = scmp.ne.s32.totalorder %s282, %s284
    %p288 = scmp.eq.s32.totalorder %s24, 0
    %p289 = por %p287, %p288
    %p290 = scmp.ne.s32.totalorder %s282, %s284
    %p291 = scmp.eq.s32.totalorder %s29, 1
    %p292 = por %p290, %p291
    %p293 = scmp.ne.s32.totalorder %s284, %s285
    %p294 = scmp.eq.s32.totalorder %s29, 0
    %p295 = por %p293, %p294
    %p296 = scmp.ne.s32.totalorder %s284, %s285
    %p297 = scmp.eq.s32.totalorder %s30, 1
    %p298 = por %p296, %p297
    %p300 = scmp.ne.s32.totalorder %s285, %s299
    %p301 = scmp.eq.s32.totalorder %s30, 0
    %p302 = por %p300, %p301
    %s304 = sadd.s32 %s303, 1
    %p307 = scmp.eq.s32.totalorder %s24, 1
    %p308 = scmp.ne.s32.totalorder %s303, %s305
    %p309 = scmp.eq.s32.totalorder %s24, 0
    %p310 = por %p308, %p309
    %p311 = scmp.ne.s32.totalorder %s303, %s305
    %p312 = scmp.eq.s32.totalorder %s29, 1
    %p313 = por %p311, %p312
    %p314 = scmp.ne.s32.totalorder %s305, %s306
    %p315 = scmp.eq.s32.totalorder %s29, 0
    %p316 = por %p314, %p315
    %p317 = scmp.ne.s32.totalorder %s305, %s306
    %p318 = scmp.eq.s32.totalorder %s30, 1
    %p319 = por %p317, %p318
    %p321 = scmp.ne.s32.totalorder %s306, %s320
    %p322 = scmp.eq.s32.totalorder %s30, 0
    %p323 = por %p321, %p322
    %s325 = sadd.s32 %s324, 1
    %p328 = scmp.eq.s32.totalorder %s24, 1
    %p329 = scmp.ne.s32.totalorder %s324, %s326
    %p330 = scmp.eq.s32.totalorder %s24, 0
    %p331 = por %p329, %p330
    %p332 = scmp.ne.s32.totalorder %s324, %s326
    %p333 = scmp.eq.s32.totalorder %s29, 1
    %p334 = por %p332, %p333
    %p335 = scmp.ne.s32.totalorder %s326, %s327
    %p336 = scmp.eq.s32.totalorder %s29, 0
    %p337 = por %p335, %p336
    %p338 = scmp.ne.s32.totalorder %s326, %s327
    %p339 = scmp.eq.s32.totalorder %s30, 1
    %p340 = por %p338, %p339
    %p342 = scmp.ne.s32.totalorder %s327, %s341
    %p343 = scmp.eq.s32.totalorder %s30, 0
    %p344 = por %p342, %p343
    %s346 = sadd.s32 %s345, 1
    %p349 = scmp.eq.s32.totalorder %s24, 1
    %p350 = scmp.ne.s32.totalorder %s345, %s347
    %p351 = scmp.eq.s32.totalorder %s24, 0
    %p352 = por %p350, %p351
    %p353 = scmp.ne.s32.totalorder %s345, %s347
    %p354 = scmp.eq.s32.totalorder %s29, 1
    %p355 = por %p353, %p354
    %p356 = scmp.ne.s32.totalorder %s347, %s348
    %p357 = scmp.eq.s32.totalorder %s29, 0
    %p358 = por %p356, %p357
    %p359 = scmp.ne.s32.totalorder %s347, %s348
    %p360 = scmp.eq.s32.totalorder %s30, 1
    %p361 = por %p359, %p360
    %p363 = scmp.ne.s32.totalorder %s348, %s362
    %p364 = scmp.eq.s32.totalorder %s30, 0
    %p365 = por %p363, %p364
    %s366 = ssub.s32 %s31, %s43
    %s367 = ssub.s32 %s32, %s39
    %s368 = sor.u32 %s366, %s367
    %p369 = scmp.eq.s32.totalorder %s368, 0
    %s371 = sadd.s32 %s370, 1
    %s372 = scalar_select %p369, %s370, %s371
    %p375 = pneg %p369
    %p376 = scmp.eq.s32.totalorder %s24, 1
    %p377 = por %p375, %p376
    %p378 = scmp.ne.s32.totalorder %s370, %s373
    %p379 = scmp.eq.s32.totalorder %s24, 0
    %p380 = por %p378, %p379
    %p381 = scmp.ne.s32.totalorder %s370, %s373
    %p382 = scmp.eq.s32.totalorder %s29, 1
    %p383 = por %p381, %p382
    %p384 = scmp.ne.s32.totalorder %s373, %s374
    %p385 = scmp.eq.s32.totalorder %s29, 0
    %p386 = por %p384, %p385
    %p387 = scmp.ne.s32.totalorder %s373, %s374
    %p388 = scmp.eq.s32.totalorder %s30, 1
    %p389 = por %p387, %p388
    %p391 = scmp.ne.s32.totalorder %s374, %s390
    %p392 = scmp.eq.s32.totalorder %s30, 0
    %p393 = por %p391, %p392
    %s394 = ssub.s32 %s31, %s43
    %s395 = ssub.s32 %s32, %s39
    %s396 = sor.u32 %s394, %s395
    %p397 = scmp.eq.s32.totalorder %s396, 0
    %s399 = sadd.s32 %s398, 1
    %s400 = scalar_select %p397, %s398, %s399
    %p403 = pneg %p397
    %p404 = scmp.eq.s32.totalorder %s24, 1
    %p405 = por %p403, %p404
    %p406 = scmp.ne.s32.totalorder %s398, %s401
    %p407 = scmp.eq.s32.totalorder %s24, 0
    %p408 = por %p406, %p407
    %p409 = scmp.ne.s32.totalorder %s398, %s401
    %p410 = scmp.eq.s32.totalorder %s29, 1
    %p411 = por %p409, %p410
    %p412 = scmp.ne.s32.totalorder %s401, %s402
    %p413 = scmp.eq.s32.totalorder %s29, 0
    %p414 = por %p412, %p413
    %p415 = scmp.ne.s32.totalorder %s401, %s402
    %p416 = scmp.eq.s32.totalorder %s30, 1
    %p417 = por %p415, %p416
    %p419 = scmp.ne.s32.totalorder %s402, %s418
    %p420 = scmp.eq.s32.totalorder %s30, 0
    %p421 = por %p419, %p420
    %s422 = ssub.s32 %s31, %s43
    %s423 = ssub.s32 %s32, %s39
    %s424 = sor.u32 %s422, %s423
    %p425 = scmp.eq.s32.totalorder %s424, 0
    %s427 = sadd.s32 %s426, 1
    %s428 = scalar_select %p425, %s426, %s427
    %p431 = pneg %p425
    %p432 = scmp.eq.s32.totalorder %s24, 1
    %p433 = por %p431, %p432
    %p434 = scmp.ne.s32.totalorder %s426, %s429
    %p435 = scmp.eq.s32.totalorder %s24, 0
    %p436 = por %p434, %p435
    %p437 = scmp.ne.s32.totalorder %s426, %s429
    %p438 = scmp.eq.s32.totalorder %s29, 1
    %p439 = por %p437, %p438
    %p440 = scmp.ne.s32.totalorder %s429, %s430
    %p441 = scmp.eq.s32.totalorder %s29, 0
    %p442 = por %p440, %p441
    %p443 = scmp.ne.s32.totalorder %s429, %s430
    %p444 = scmp.eq.s32.totalorder %s30, 1
    %p445 = por %p443, %p444
    %p447 = scmp.ne.s32.totalorder %s430, %s446
    %p448 = scmp.eq.s32.totalorder %s30, 0
    %p449 = por %p447, %p448
    %s450 = ssub.s32 %s31, %s43
    %s451 = ssub.s32 %s32, %s39
    %s452 = sor.u32 %s450, %s451
    %p453 = scmp.eq.s32.totalorder %s452, 0
    %s455 = sadd.s32 %s454, 1
    %s456 = scalar_select %p453, %s454, %s455
    %p459 = pneg %p453
    %p460 = scmp.eq.s32.totalorder %s24, 1
    %p461 = por %p459, %p460
    %p462 = scmp.ne.s32.totalorder %s454, %s457
    %p463 = scmp.eq.s32.totalorder %s24, 0
    %p464 = por %p462, %p463
    %p465 = scmp.ne.s32.totalorder %s454, %s457
    %p466 = scmp.eq.s32.totalorder %s29, 1
    %p467 = por %p465, %p466
    %p468 = scmp.ne.s32.totalorder %s457, %s458
    %p469 = scmp.eq.s32.totalorder %s29, 0
    %p470 = por %p468, %p469
    %p471 = scmp.ne.s32.totalorder %s457, %s458
    %p472 = scmp.eq.s32.totalorder %s30, 1
    %p473 = por %p471, %p472
    %p475 = scmp.ne.s32.totalorder %s458, %s474
    %p476 = scmp.eq.s32.totalorder %s30, 0
    %p477 = por %p475, %p476
    %p478 = scmp.le.s32.totalorder 1, %s24
    %p479 = scmp.lt.s32.totalorder %s24, 3
    %p480 = pnand %p478, %p479
    %p481 = pneg %p480
    // Predicated region
    $region9: #{block_rgbt_2to1_forward.1} parent=5 // pred_check
      _
    $region10: #{block_rgbt_2to1_forward.1} parent=5 // pred_check_branch
      %483 = sbr.rel (%p480) target = $region12
    $region11: #{block_rgbt_2to1_forward.1} parent=5 // pred_region
      %s484 = ssub.s32 %s24, 1
      // Predicated region
      $region13: #{block_rgbt_2to1_forward.1} parent=11 // pred_check
        %p485 = pneg %p169
      $region14: #{block_rgbt_2to1_forward.1} parent=11 // pred_check_branch
        %487 = sbr.rel (%p485) target = $region16
      $region15: #{block_rgbt_2to1_forward.1} parent=11 // pred_region
        _
      $region16: #{block_rgbt_2to1_forward.1} parent=11 // pred_fallthru
        _
      // Predicated region
      $region17: #{block_rgbt_2to1_forward.1} parent=11 // pred_check
        %p488 = pneg %p190
      $region18: #{block_rgbt_2to1_forward.1} parent=11 // pred_check_branch
        %490 = sbr.rel (%p488) target = $region20
      $region19: #{block_rgbt_2to1_forward.1} parent=11 // pred_region
        _
      $region20: #{block_rgbt_2to1_forward.1} parent=11 // pred_fallthru
        _
      // Predicated region
      $region21: #{block_rgbt_2to1_forward.1} parent=11 // pred_check
        %p491 = pneg %p211
      $region22: #{block_rgbt_2to1_forward.1} parent=11 // pred_check_branch
        %493 = sbr.rel (%p491) target = $region24
      $region23: #{block_rgbt_2to1_forward.1} parent=11 // pred_region
        _
      $region24: #{block_rgbt_2to1_forward.1} parent=11 // pred_fallthru
        _
      // Predicated region
      $region25: #{block_rgbt_2to1_forward.1} parent=11 // pred_check
        %p494 = pneg %p232
      $region26: #{block_rgbt_2to1_forward.1} parent=11 // pred_check_branch
        %496 = sbr.rel (%p494) target = $region28
      $region27: #{block_rgbt_2to1_forward.1} parent=11 // pred_region
        _
      $region28: #{block_rgbt_2to1_forward.1} parent=11 // pred_fallthru
        _
      // Predicated region
      $region29: #{block_rgbt_2to1_forward.1} parent=11 // pred_check
        %p497 = pneg %p253
      $region30: #{block_rgbt_2to1_forward.1} parent=11 // pred_check_branch
        %499 = sbr.rel (%p497) target = $region32
      $region31: #{block_rgbt_2to1_forward.1} parent=11 // pred_region
        _
      $region32: #{block_rgbt_2to1_forward.1} parent=11 // pred_fallthru
        _
      // Predicated region
      $region33: #{block_rgbt_2to1_forward.1} parent=11 // pred_check
        %p500 = pneg %p274
      $region34: #{block_rgbt_2to1_forward.1} parent=11 // pred_check_branch
        %502 = sbr.rel (%p500) target = $region36
      $region35: #{block_rgbt_2to1_forward.1} parent=11 // pred_region
        _
      $region36: #{block_rgbt_2to1_forward.1} parent=11 // pred_fallthru
        _
      // Predicated region
      $region37: #{block_rgbt_2to1_forward.1} parent=11 // pred_check
        %p503 = pneg %p295
      $region38: #{block_rgbt_2to1_forward.1} parent=11 // pred_check_branch
        %505 = sbr.rel (%p503) target = $region40
      $region39: #{block_rgbt_2to1_forward.1} parent=11 // pred_region
        _
      $region40: #{block_rgbt_2to1_forward.1} parent=11 // pred_fallthru
        _
      // Predicated region
      $region41: #{block_rgbt_2to1_forward.1} parent=11 // pred_check
        %p506 = pneg %p316
      $region42: #{block_rgbt_2to1_forward.1} parent=11 // pred_check_branch
        %508 = sbr.rel (%p506) target = $region44
      $region43: #{block_rgbt_2to1_forward.1} parent=11 // pred_region
        _
      $region44: #{block_rgbt_2to1_forward.1} parent=11 // pred_fallthru
        _
      // Predicated region
      $region45: #{block_rgbt_2to1_forward.1} parent=11 // pred_check
        %p509 = pneg %p337
      $region46: #{block_rgbt_2to1_forward.1} parent=11 // pred_check_branch
        %511 = sbr.rel (%p509) target = $region48
      $region47: #{block_rgbt_2to1_forward.1} parent=11 // pred_region
        _
      $region48: #{block_rgbt_2to1_forward.1} parent=11 // pred_fallthru
        _
      // Predicated region
      $region49: #{block_rgbt_2to1_forward.1} parent=11 // pred_check
        %p512 = pneg %p358
      $region50: #{block_rgbt_2to1_forward.1} parent=11 // pred_check_branch
        %514 = sbr.rel (%p512) target = $region52
      $region51: #{block_rgbt_2to1_forward.1} parent=11 // pred_region
        _
      $region52: #{block_rgbt_2to1_forward.1} parent=11 // pred_fallthru
        _
    $region12: #{block_rgbt_2to1_forward.1} parent=5 // pred_fallthru
      _
    %p515 = scmp.lt.s32.totalorder %s24, 2
    // Predicated region
    $region53: #{block_rgbt_2to1_forward.1} parent=5 // pred_check
      %p516 = pneg %p515
    $region54: #{block_rgbt_2to1_forward.1} parent=5 // pred_check_branch
      %518 = sbr.rel (%p516) target = $region56
    $region55: #{block_rgbt_2to1_forward.1} parent=5 // pred_region
      // Predicated region
      $region57: #{block_rgbt_2to1_forward.1} parent=55 // pred_check
        %p519 = pneg %p58
      $region58: #{block_rgbt_2to1_forward.1} parent=55 // pred_check_branch
        %521 = sbr.rel (%p519) target = $region60
      $region59: #{block_rgbt_2to1_forward.1} parent=55 // pred_region
        %s522 = smul.u32 2, %s32
        %p523 = scmp.lt.s32.totalorder %s31, 1
        %s524 = scalar_select %p523, %s31, 1
        %p525 = scmp.lt.s32.totalorder %s522, 1
        %s526 = scalar_select %p525, %s522, 1
        %s527 = smul.addr %s524, 2
        %s528 = sadd.s32 %s526, %s527
        %s529 = smul.addr %s528, 8
        %s530 = scalar_lea.vmem %s0, %s529
        %s531 = smul.u32 2, %s32
      $region60: #{block_rgbt_2to1_forward.1} parent=55 // pred_fallthru
        _
      // Predicated region
      $region61: #{block_rgbt_2to1_forward.1} parent=55 // pred_check
        %p532 = pneg %p86
      $region62: #{block_rgbt_2to1_forward.1} parent=55 // pred_check_branch
        %534 = sbr.rel (%p532) target = $region64
      $region63: #{block_rgbt_2to1_forward.1} parent=55 // pred_region
        %s535 = smul.u32 2, %s32
        %p536 = scmp.lt.s32.totalorder %s31, 1
        %s537 = scalar_select %p536, %s31, 1
        %p538 = scmp.lt.s32.totalorder %s535, 1
        %s539 = scalar_select %p538, %s535, 1
        %s540 = smul.addr %s537, 2
        %s541 = sadd.s32 %s539, %s540
        %s542 = smul.addr %s541, 8
        %s543 = scalar_lea.vmem %s1, %s542
        %s544 = smul.u32 2, %s32
      $region64: #{block_rgbt_2to1_forward.1} parent=55 // pred_fallthru
        _
      // Predicated region
      $region65: #{block_rgbt_2to1_forward.1} parent=55 // pred_check
        %p545 = pneg %p114
      $region66: #{block_rgbt_2to1_forward.1} parent=55 // pred_check_branch
        %547 = sbr.rel (%p545) target = $region68
      $region67: #{block_rgbt_2to1_forward.1} parent=55 // pred_region
        %s548 = smul.u32 2, %s32
        %p549 = scmp.lt.s32.totalorder %s31, 1
        %s550 = scalar_select %p549, %s31, 1
        %p551 = scmp.lt.s32.totalorder %s548, 1
        %s552 = scalar_select %p551, %s548, 1
        %s553 = smul.addr %s550, 2
        %s554 = sadd.s32 %s552, %s553
        %s555 = smul.addr %s554, 8
        %s556 = scalar_lea.vmem %s2, %s555
        %s557 = smul.u32 2, %s32
      $region68: #{block_rgbt_2to1_forward.1} parent=55 // pred_fallthru
        _
      // Predicated region
      $region69: #{block_rgbt_2to1_forward.1} parent=55 // pred_check
        %p558 = pneg %p142
      $region70: #{block_rgbt_2to1_forward.1} parent=55 // pred_check_branch
        %560 = sbr.rel (%p558) target = $region72
      $region71: #{block_rgbt_2to1_forward.1} parent=55 // pred_region
        %s561 = smul.u32 2, %s32
        %p562 = scmp.lt.s32.totalorder %s31, 1
        %s563 = scalar_select %p562, %s31, 1
        %p564 = scmp.lt.s32.totalorder %s561, 1
        %s565 = scalar_select %p564, %s561, 1
        %s566 = smul.addr %s563, 2
        %s567 = sadd.s32 %s565, %s566
        %s568 = smul.addr %s567, 8
        %s569 = scalar_lea.vmem %s3, %s568
        %s570 = smul.u32 2, %s32
      $region72: #{block_rgbt_2to1_forward.1} parent=55 // pred_fallthru
        _
    $region56: #{block_rgbt_2to1_forward.1} parent=5 // pred_fallthru
      _
    %p571 = scmp.le.s32.totalorder 1, %s24
    %p572 = scmp.lt.s32.totalorder %s24, 3
    %p573 = pnand %p571, %p572
    %p574 = pneg %p573
    // Predicated region
    $region73: #{block_rgbt_2to1_forward.1} parent=5 // pred_check
      _
    $region74: #{block_rgbt_2to1_forward.1} parent=5 // pred_check_branch
      %576 = sbr.rel (%p573) target = $region76
    $region75: #{block_rgbt_2to1_forward.1} parent=5 // pred_region
      %s577 = ssub.s32 %s24, 1
      %s578 = smul.u32 2, %s34
      %p579 = scmp.lt.s32.totalorder %s33, 1
      %s580 = scalar_select %p579, %s33, 1
      %p581 = scmp.lt.s32.totalorder %s578, 1
      %s582 = scalar_select %p581, %s578, 1
      %s583 = smul.addr %s580, 2
      %s584 = sadd.s32 %s582, %s583
      %s585 = smul.addr %s584, 8
      %s586 = scalar_lea.vmem %s0, %s585
      %p587 = pneg %p64
      %p588 = pneg %p61
      %s589 = smul.u32 2, %s34
      %p590 = scmp.lt.s32.totalorder %s33, 1
      %s591 = scalar_select %p590, %s33, 1
      %p592 = scmp.lt.s32.totalorder %s589, 1
      %s593 = scalar_select %p592, %s589, 1
      %s594 = smul.addr %s591, 2
      %s595 = sadd.s32 %s593, %s594
      %s596 = smul.addr %s595, 8
      %s597 = scalar_lea.vmem %s1, %s596
      %p598 = pneg %p92
      %p599 = pneg %p89
      %s600 = smul.u32 2, %s34
      %p601 = scmp.lt.s32.totalorder %s33, 1
      %s602 = scalar_select %p601, %s33, 1
      %p603 = scmp.lt.s32.totalorder %s600, 1
      %s604 = scalar_select %p603, %s600, 1
      %s605 = smul.addr %s602, 2
      %s606 = sadd.s32 %s604, %s605
      %s607 = smul.addr %s606, 8
      %s608 = scalar_lea.vmem %s2, %s607
      %p609 = pneg %p120
      %p610 = pneg %p117
      %s611 = smul.u32 2, %s34
      %p612 = scmp.lt.s32.totalorder %s33, 1
      %s613 = scalar_select %p612, %s33, 1
      %p614 = scmp.lt.s32.totalorder %s611, 1
      %s615 = scalar_select %p614, %s611, 1
      %s616 = smul.addr %s613, 2
      %s617 = sadd.s32 %s615, %s616
      %s618 = smul.addr %s617, 8
      %s619 = scalar_lea.vmem %s3, %s618
      %p620 = pneg %p148
      %p621 = pneg %p145
      %p622 = pneg %p169
      %p623 = pneg %p166
      %p624 = pneg %p190
      %p625 = pneg %p187
      %p626 = pneg %p211
      %p627 = pneg %p208
      %p628 = pneg %p232
      %p629 = pneg %p229
      %p630 = pneg %p253
      %p631 = pneg %p250
      %p632 = pneg %p274
      %p633 = pneg %p271
      %p634 = pneg %p295
      %p635 = pneg %p292
      %p636 = pneg %p316
      %p637 = pneg %p313
      %p638 = pneg %p337
      %p639 = pneg %p334
      %p640 = pneg %p358
      %p641 = pneg %p355
      %p642 = pneg %p386
      %p643 = pneg %p383
      %s644 = smul.u32 2, %s34
      %p645 = scmp.lt.s32.totalorder %s33, 1
      %s646 = scalar_select %p645, %s33, 1
      %p647 = scmp.lt.s32.totalorder %s644, 1
      %s648 = scalar_select %p647, %s644, 1
      %s649 = smul.addr %s646, 2
      %s650 = sadd.s32 %s648, %s649
      %s651 = smul.addr %s650, 8
      %s652 = scalar_lea.vmem %s14, %s651
      %p653 = pneg %p414
      %p654 = pneg %p411
      %s655 = smul.u32 2, %s34
      %p656 = scmp.lt.s32.totalorder %s33, 1
      %s657 = scalar_select %p656, %s33, 1
      %p658 = scmp.lt.s32.totalorder %s655, 1
      %s659 = scalar_select %p658, %s655, 1
      %s660 = smul.addr %s657, 2
      %s661 = sadd.s32 %s659, %s660
      %s662 = smul.addr %s661, 8
      %s663 = scalar_lea.vmem %s15, %s662
      %p664 = pneg %p442
      %p665 = pneg %p439
      %s666 = smul.u32 2, %s34
      %p667 = scmp.lt.s32.totalorder %s33, 1
      %s668 = scalar_select %p667, %s33, 1
      %p669 = scmp.lt.s32.totalorder %s666, 1
      %s670 = scalar_select %p669, %s666, 1
      %s671 = smul.addr %s668, 2
      %s672 = sadd.s32 %s670, %s671
      %s673 = smul.addr %s672, 8
      %s674 = scalar_lea.vmem %s16, %s673
      %p675 = pneg %p470
      %p676 = pneg %p467
      %s677 = smul.u32 2, %s34
      %p678 = scmp.lt.s32.totalorder %s33, 1
      %s679 = scalar_select %p678, %s33, 1
      %p680 = scmp.lt.s32.totalorder %s677, 1
      %s681 = scalar_select %p680, %s677, 1
      %s682 = smul.addr %s679, 2
      %s683 = sadd.s32 %s681, %s682
      %s684 = smul.addr %s683, 8
      %s685 = scalar_lea.vmem %s17, %s684
      %s686 = smul.u32 2, %s34
      %p687 = scmp.lt.s32.totalorder %s33, 1
      %s688 = scalar_select %p687, %s33, 1
      %p689 = scmp.lt.s32.totalorder %s686, 1
      %s690 = scalar_select %p689, %s686, 1
      %s691 = smul.addr %s688, 2
      %s692 = sadd.s32 %s690, %s691
      %s693 = smul.addr %s692, 8
      %s694 = scalar_lea.vmem %s0, %s693
      %s695 = smul.u32 2, %s34
      %s696 = smul.u32 2, %s34
      %p697 = scmp.lt.s32.totalorder %s33, 1
      %s698 = scalar_select %p697, %s33, 1
      %p699 = scmp.lt.s32.totalorder %s696, 1
      %s700 = scalar_select %p699, %s696, 1
      %s701 = smul.addr %s698, 2
      %s702 = sadd.s32 %s700, %s701
      %s703 = smul.addr %s702, 8
      %s704 = scalar_lea.vmem %s1, %s703
      %s705 = smul.u32 2, %s34
      %s706 = smul.u32 2, %s34
      %p707 = scmp.lt.s32.totalorder %s33, 1
      %s708 = scalar_select %p707, %s33, 1
      %p709 = scmp.lt.s32.totalorder %s706, 1
      %s710 = scalar_select %p709, %s706, 1
      %s711 = smul.addr %s708, 2
      %s712 = sadd.s32 %s710, %s711
      %s713 = smul.addr %s712, 8
      %s714 = scalar_lea.vmem %s2, %s713
      %s715 = smul.u32 2, %s34
      %s716 = smul.u32 2, %s34
      %p717 = scmp.lt.s32.totalorder %s33, 1
      %s718 = scalar_select %p717, %s33, 1
      %p719 = scmp.lt.s32.totalorder %s716, 1
      %s720 = scalar_select %p719, %s716, 1
      %s721 = smul.addr %s718, 2
      %s722 = sadd.s32 %s720, %s721
      %s723 = smul.addr %s722, 8
      %s724 = scalar_lea.vmem %s3, %s723
      %s725 = smul.u32 2, %s34
      %s726 = smul.u32 2, %s34
      %p727 = scmp.lt.s32.totalorder %s33, 1
      %s728 = scalar_select %p727, %s33, 1
      %p729 = scmp.lt.s32.totalorder %s726, 1
      %s730 = scalar_select %p729, %s726, 1
      %s731 = smul.addr %s728, 2
      %s732 = sadd.s32 %s730, %s731
      %s733 = smul.addr %s732, 8
      %s734 = scalar_lea.vmem %s14, %s733
      %s735 = smul.u32 2, %s34
      %s736 = smul.u32 2, %s34
      %p737 = scmp.lt.s32.totalorder %s33, 1
      %s738 = scalar_select %p737, %s33, 1
      %p739 = scmp.lt.s32.totalorder %s736, 1
      %s740 = scalar_select %p739, %s736, 1
      %s741 = smul.addr %s738, 2
      %s742 = sadd.s32 %s740, %s741
      %s743 = smul.addr %s742, 8
      %s744 = scalar_lea.vmem %s15, %s743
      %s745 = smul.u32 2, %s34
      %s746 = smul.u32 2, %s34
      %p747 = scmp.lt.s32.totalorder %s33, 1
      %s748 = scalar_select %p747, %s33, 1
      %p749 = scmp.lt.s32.totalorder %s746, 1
      %s750 = scalar_select %p749, %s746, 1
      %s751 = smul.addr %s748, 2
      %s752 = sadd.s32 %s750, %s751
      %s753 = smul.addr %s752, 8
      %s754 = scalar_lea.vmem %s16, %s753
      %s755 = smul.u32 2, %s34
      %s756 = smul.u32 2, %s34
      %p757 = scmp.lt.s32.totalorder %s33, 1
      %s758 = scalar_select %p757, %s33, 1
      %p759 = scmp.lt.s32.totalorder %s756, 1
      %s760 = scalar_select %p759, %s756, 1
      %s761 = smul.addr %s758, 2
      %s762 = sadd.s32 %s760, %s761
      %s763 = smul.addr %s762, 8
      %s764 = scalar_lea.vmem %s17, %s763
      %s765 = smul.u32 2, %s34
      %v766 = vld [vmem:[%s4] sm:$0xff]
      %vm767 = vcmp.gt.f32.partialorder %v766, 0.5
      %v768 = vld [vmem:[%s694] sm:$0xff]
      %v769 = vld [vmem:[%s694 + $0x8] sm:$0xff]
      %v770 = vld [vmem:[%s704] sm:$0xff]
      %v771 = vld [vmem:[%s704 + $0x8] sm:$0xff]
      %v772 = vld [vmem:[%s714] sm:$0xff]
      %v773 = vld [vmem:[%s714 + $0x8] sm:$0xff]
      %v774 = vld [vmem:[%s724] sm:$0xff]
      %v775 = vld [vmem:[%s724 + $0x8] sm:$0xff]
      %776 = vrot.lane.b32.xlu0 %v768, 127
      %v777 = vpop.permute.xlu0 %776
      %778 = vrot.lane.b32.xlu0 %v770, 127
      %v779 = vpop.permute.xlu0 %778
      %780 = vrot.lane.b32.xlu0 %v772, 127
      %v781 = vpop.permute.xlu0 %780
      %782 = vrot.lane.b32.xlu0 %v774, 127
      %v783 = vpop.permute.xlu0 %782
      %784 = vrot.lane.b32.xlu0 %v769, 127
      %v785 = vpop.permute.xlu0 %784
      %786 = vrot.lane.b32.xlu0 %v771, 127
      %v787 = vpop.permute.xlu0 %786
      %788 = vrot.lane.b32.xlu0 %v773, 127
      %v789 = vpop.permute.xlu0 %788
      %790 = vrot.lane.b32.xlu0 %v775, 127
      %v791 = vpop.permute.xlu0 %790
      %v792 = vlaneseq
      %v793 = vand.u32 %v792, 127
      %vm794 = vcmp.lt.s32.totalorder %v793, 127
      %v795 = vsel %vm794, %v777, %v785
      %v796 = vsel %vm794, %v779, %v787
      %v797 = vsel %vm794, %v781, %v789
      %v798 = vsel %vm794, %v783, %v791
      %v799 = vsel %vm794, %v785, %v777
      %v800 = vsel %vm794, %v787, %v779
      %v801 = vsel %vm794, %v789, %v781
      %v802 = vsel %vm794, %v791, %v783
      %v803 = vmax.f32 %v768, %v795
      %v804 = vmax.f32 %v769, %v799
      %v805 = vmax.f32 %v770, %v796
      %v806 = vmax.f32 %v771, %v800
      %v807 = vmax.f32 %v772, %v797
      %v808 = vmax.f32 %v773, %v801
      %v809 = vmax.f32 %v774, %v798
      %v810 = vmax.f32 %v775, %v802
      %811 = vrot.lane.b32.xlu0 %v803, 1
      %v812 = vpop.permute.xlu0 %811
      %813 = vrot.lane.b32.xlu0 %v805, 1
      %v814 = vpop.permute.xlu0 %813
      %815 = vrot.lane.b32.xlu0 %v807, 1
      %v816 = vpop.permute.xlu0 %815
      %817 = vrot.lane.b32.xlu0 %v809, 1
      %v818 = vpop.permute.xlu0 %817
      %819 = vrot.lane.b32.xlu0 %v804, 1
      %v820 = vpop.permute.xlu0 %819
      %821 = vrot.lane.b32.xlu0 %v806, 1
      %v822 = vpop.permute.xlu0 %821
      %823 = vrot.lane.b32.xlu0 %v808, 1
      %v824 = vpop.permute.xlu0 %823
      %825 = vrot.lane.b32.xlu0 %v810, 1
      %v826 = vpop.permute.xlu0 %825
      %vm827 = vcmp.lt.s32.totalorder %v793, 1
      %v828 = vsel %vm827, %v812, %v820
      %v829 = vsel %vm827, %v814, %v822
      %v830 = vsel %vm827, %v816, %v824
      %v831 = vsel %vm827, %v818, %v826
      %v832 = vsel %vm827, %v820, %v812
      %v833 = vsel %vm827, %v822, %v814
      %v834 = vsel %vm827, %v824, %v816
      %v835 = vsel %vm827, %v826, %v818
      %v836 = vsel %vm767, 1, 0
      %v837 = vlaneseq
      %v838 = vshrl.u32 %v837, 7
      %v839 = vsub.s32 0, %v838
      %v840 = vrot.slane %v836, %v839
      %v841 = vlaneseq
      %v842 = vshrl.u32 %v841, 7
      %v843 = vsub.s32 4, %v842
      %v844 = vrot.slane %v836, %v843
      %v845 = vlaneseq
      %v846 = vshrl.u32 %v845, 7
      %v847 = vsub.s32 0, %v846
      %v848 = vrot.slane %v840, %v847
      %v849 = vlaneseq
      %v850 = vshrl.u32 %v849, 7
      %v851 = vsub.s32 0, %v850
      %v852 = vrot.slane %v844, %v851
      %vm853 = vcmp.eq.s32.totalorder %v848, 1
      %vm854 = vcmp.eq.s32.totalorder %v852, 1
      %v855 = vsel %vm853, %v803, %v832
      %v856 = vsel %vm854, %v804, %v828
      %v857 = vsel %vm853, %v805, %v833
      %v858 = vsel %vm854, %v806, %v829
      %v859 = vsel %vm853, %v807, %v834
      %v860 = vsel %vm854, %v808, %v830
      %v861 = vsel %vm853, %v809, %v835
      %v862 = vsel %vm854, %v810, %v831
      %863 = vrot.lane.b32.xlu0 %v855, 112
      %v864 = vpop.permute.xlu0 %863
      %865 = vrot.lane.b32.xlu0 %v857, 112
      %v866 = vpop.permute.xlu0 %865
      %867 = vrot.lane.b32.xlu0 %v859, 112
      %v868 = vpop.permute.xlu0 %867
      %869 = vrot.lane.b32.xlu0 %v861, 112
      %v870 = vpop.permute.xlu0 %869
      %871 = vrot.lane.b32.xlu0 %v856, 112
      %v872 = vpop.permute.xlu0 %871
      %873 = vrot.lane.b32.xlu0 %v858, 112
      %v874 = vpop.permute.xlu0 %873
      %875 = vrot.lane.b32.xlu0 %v860, 112
      %v876 = vpop.permute.xlu0 %875
      %877 = vrot.lane.b32.xlu0 %v862, 112
      %v878 = vpop.permute.xlu0 %877
      %vm879 = vcmp.lt.s32.totalorder %v793, 112
      %v880 = vsel %vm879, %v864, %v872
      %v881 = vsel %vm879, %v866, %v874
      %v882 = vsel %vm879, %v868, %v876
      %v883 = vsel %vm879, %v870, %v878
      %v884 = vsel %vm879, %v872, %v864
      %v885 = vsel %vm879, %v874, %v866
      %v886 = vsel %vm879, %v876, %v868
      %v887 = vsel %vm879, %v878, %v870
      %v888 = vmax.f32 %v855, %v880
      %v889 = vmax.f32 %v856, %v884
      %v890 = vmax.f32 %v857, %v881
      %v891 = vmax.f32 %v858, %v885
      %v892 = vmax.f32 %v859, %v882
      %v893 = vmax.f32 %v860, %v886
      %v894 = vmax.f32 %v861, %v883
      %v895 = vmax.f32 %v862, %v887
      %896 = vrot.lane.b32.xlu0 %v888, 16
      %v897 = vpop.permute.xlu0 %896
      %898 = vrot.lane.b32.xlu0 %v890, 16
      %v899 = vpop.permute.xlu0 %898
      %900 = vrot.lane.b32.xlu0 %v892, 16
      %v901 = vpop.permute.xlu0 %900
      %902 = vrot.lane.b32.xlu0 %v894, 16
      %v903 = vpop.permute.xlu0 %902
      %904 = vrot.lane.b32.xlu0 %v889, 16
      %v905 = vpop.permute.xlu0 %904
      %906 = vrot.lane.b32.xlu0 %v891, 16
      %v907 = vpop.permute.xlu0 %906
      %908 = vrot.lane.b32.xlu0 %v893, 16
      %v909 = vpop.permute.xlu0 %908
      %910 = vrot.lane.b32.xlu0 %v895, 16
      %v911 = vpop.permute.xlu0 %910
      %vm912 = vcmp.lt.s32.totalorder %v793, 16
      %v913 = vsel %vm912, %v897, %v905
      %v914 = vsel %vm912, %v899, %v907
      %v915 = vsel %vm912, %v901, %v909
      %v916 = vsel %vm912, %v903, %v911
      %v917 = vsel %vm912, %v905, %v897
      %v918 = vsel %vm912, %v907, %v899
      %v919 = vsel %vm912, %v909, %v901
      %v920 = vsel %vm912, %v911, %v903
      %v921 = vlaneseq
      %v922 = vshrl.u32 %v921, 7
      %v923 = vsub.s32 1, %v922
      %v924 = vrot.slane %v836, %v923
      %v925 = vlaneseq
      %v926 = vshrl.u32 %v925, 7
      %v927 = vsub.s32 5, %v926
      %v928 = vrot.slane %v836, %v927
      %v929 = vlaneseq
      %v930 = vshrl.u32 %v929, 7
      %v931 = vsub.s32 1, %v930
      %v932 = vrot.slane %v924, %v931
      %v933 = vlaneseq
      %v934 = vshrl.u32 %v933, 7
      %v935 = vsub.s32 1, %v934
      %v936 = vrot.slane %v928, %v935
      %vm937 = vcmp.eq.s32.totalorder %v932, 1
      %vm938 = vcmp.eq.s32.totalorder %v936, 1
      %v939 = vsel %vm937, %v888, %v917
      %v940 = vsel %vm938, %v889, %v913
      %v941 = vsel %vm937, %v890, %v918
      %v942 = vsel %vm938, %v891, %v914
      %v943 = vsel %vm937, %v892, %v919
      %v944 = vsel %vm938, %v893, %v915
      %v945 = vsel %vm937, %v894, %v920
      %v946 = vsel %vm938, %v895, %v916
      %947 = vrot.lane.b32.xlu0 %v939, 126
      %v948 = vpop.permute.xlu0 %947
      %949 = vrot.lane.b32.xlu0 %v941, 126
      %v950 = vpop.permute.xlu0 %949
      %951 = vrot.lane.b32.xlu0 %v943, 126
      %v952 = vpop.permute.xlu0 %951
      %953 = vrot.lane.b32.xlu0 %v945, 126
      %v954 = vpop.permute.xlu0 %953
      %955 = vrot.lane.b32.xlu0 %v940, 126
      %v956 = vpop.permute.xlu0 %955
      %957 = vrot.lane.b32.xlu0 %v942, 126
      %v958 = vpop.permute.xlu0 %957
      %959 = vrot.lane.b32.xlu0 %v944, 126
      %v960 = vpop.permute.xlu0 %959
      %961 = vrot.lane.b32.xlu0 %v946, 126
      %v962 = vpop.permute.xlu0 %961
      %vm963 = vcmp.lt.s32.totalorder %v793, 126
      %v964 = vsel %vm963, %v948, %v956
      %v965 = vsel %vm963, %v950, %v958
      %v966 = vsel %vm963, %v952, %v960
      %v967 = vsel %vm963, %v954, %v962
      %v968 = vsel %vm963, %v956, %v948
      %v969 = vsel %vm963, %v958, %v950
      %v970 = vsel %vm963, %v960, %v952
      %v971 = vsel %vm963, %v962, %v954
      %v972 = vmax.f32 %v939, %v964
      %v973 = vmax.f32 %v940, %v968
      %v974 = vmax.f32 %v941, %v965
      %v975 = vmax.f32 %v942, %v969
      %v976 = vmax.f32 %v943, %v966
      %v977 = vmax.f32 %v944, %v970
      %v978 = vmax.f32 %v945, %v967
      %v979 = vmax.f32 %v946, %v971
      %980 = vrot.lane.b32.xlu0 %v972, 2
      %v981 = vpop.permute.xlu0 %980
      %982 = vrot.lane.b32.xlu0 %v974, 2
      %v983 = vpop.permute.xlu0 %982
      %984 = vrot.lane.b32.xlu0 %v976, 2
      %v985 = vpop.permute.xlu0 %984
      %986 = vrot.lane.b32.xlu0 %v978, 2
      %v987 = vpop.permute.xlu0 %986
      %988 = vrot.lane.b32.xlu0 %v973, 2
      %v989 = vpop.permute.xlu0 %988
      %990 = vrot.lane.b32.xlu0 %v975, 2
      %v991 = vpop.permute.xlu0 %990
      %992 = vrot.lane.b32.xlu0 %v977, 2
      %v993 = vpop.permute.xlu0 %992
      %994 = vrot.lane.b32.xlu0 %v979, 2
      %v995 = vpop.permute.xlu0 %994
      %vm996 = vcmp.lt.s32.totalorder %v793, 2
      %v997 = vsel %vm996, %v981, %v989
      %v998 = vsel %vm996, %v983, %v991
      %v999 = vsel %vm996, %v985, %v993
      %v1000 = vsel %vm996, %v987, %v995
      %v1001 = vsel %vm996, %v989, %v981
      %v1002 = vsel %vm996, %v991, %v983
      %v1003 = vsel %vm996, %v993, %v985
      %v1004 = vsel %vm996, %v995, %v987
      %v1005 = vlaneseq
      %v1006 = vshrl.u32 %v1005, 7
      %v1007 = vsub.s32 2, %v1006
      %v1008 = vrot.slane %v836, %v1007
      %v1009 = vlaneseq
      %v1010 = vshrl.u32 %v1009, 7
      %v1011 = vsub.s32 6, %v1010
      %v1012 = vrot.slane %v836, %v1011
      %v1013 = vlaneseq
      %v1014 = vshrl.u32 %v1013, 7
      %v1015 = vsub.s32 2, %v1014
      %v1016 = vrot.slane %v1008, %v1015
      %v1017 = vlaneseq
      %v1018 = vshrl.u32 %v1017, 7
      %v1019 = vsub.s32 2, %v1018
      %v1020 = vrot.slane %v1012, %v1019
      %vm1021 = vcmp.eq.s32.totalorder %v1016, 1
      %vm1022 = vcmp.eq.s32.totalorder %v1020, 1
      %v1023 = vsel %vm1021, %v972, %v1001
      %v1024 = vsel %vm1022, %v973, %v997
      %v1025 = vsel %vm1021, %v974, %v1002
      %v1026 = vsel %vm1022, %v975, %v998
      %v1027 = vsel %vm1021, %v976, %v1003
      %v1028 = vsel %vm1022, %v977, %v999
      %v1029 = vsel %vm1021, %v978, %v1004
      %v1030 = vsel %vm1022, %v979, %v1000
      %1031 = vrot.lane.b32.xlu0 %v1023, 96
      %v1032 = vpop.permute.xlu0 %1031
      %1033 = vrot.lane.b32.xlu0 %v1025, 96
      %v1034 = vpop.permute.xlu0 %1033
      %1035 = vrot.lane.b32.xlu0 %v1027, 96
      %v1036 = vpop.permute.xlu0 %1035
      %1037 = vrot.lane.b32.xlu0 %v1029, 96
      %v1038 = vpop.permute.xlu0 %1037
      %1039 = vrot.lane.b32.xlu0 %v1024, 96
      %v1040 = vpop.permute.xlu0 %1039
      %1041 = vrot.lane.b32.xlu0 %v1026, 96
      %v1042 = vpop.permute.xlu0 %1041
      %1043 = vrot.lane.b32.xlu0 %v1028, 96
      %v1044 = vpop.permute.xlu0 %1043
      %1045 = vrot.lane.b32.xlu0 %v1030, 96
      %v1046 = vpop.permute.xlu0 %1045
      %vm1047 = vcmp.lt.s32.totalorder %v793, 96
      %v1048 = vsel %vm1047, %v1032, %v1040
      %v1049 = vsel %vm1047, %v1034, %v1042
      %v1050 = vsel %vm1047, %v1036, %v1044
      %v1051 = vsel %vm1047, %v1038, %v1046
      %v1052 = vsel %vm1047, %v1040, %v1032
      %v1053 = vsel %vm1047, %v1042, %v1034
      %v1054 = vsel %vm1047, %v1044, %v1036
      %v1055 = vsel %vm1047, %v1046, %v1038
      %v1056 = vmax.f32 %v1023, %v1048
      %v1057 = vmax.f32 %v1024, %v1052
      %v1058 = vmax.f32 %v1025, %v1049
      %v1059 = vmax.f32 %v1026, %v1053
      %v1060 = vmax.f32 %v1027, %v1050
      %v1061 = vmax.f32 %v1028, %v1054
      %v1062 = vmax.f32 %v1029, %v1051
      %v1063 = vmax.f32 %v1030, %v1055
      %1064 = vrot.lane.b32.xlu0 %v1056, 32
      %v1065 = vpop.permute.xlu0 %1064
      %1066 = vrot.lane.b32.xlu0 %v1058, 32
      %v1067 = vpop.permute.xlu0 %1066
      %1068 = vrot.lane.b32.xlu0 %v1060, 32
      %v1069 = vpop.permute.xlu0 %1068
      %1070 = vrot.lane.b32.xlu0 %v1062, 32
      %v1071 = vpop.permute.xlu0 %1070
      %1072 = vrot.lane.b32.xlu0 %v1057, 32
      %v1073 = vpop.permute.xlu0 %1072
      %1074 = vrot.lane.b32.xlu0 %v1059, 32
      %v1075 = vpop.permute.xlu0 %1074
      %1076 = vrot.lane.b32.xlu0 %v1061, 32
      %v1077 = vpop.permute.xlu0 %1076
      %1078 = vrot.lane.b32.xlu0 %v1063, 32
      %v1079 = vpop.permute.xlu0 %1078
      %vm1080 = vcmp.lt.s32.totalorder %v793, 32
      %v1081 = vsel %vm1080, %v1065, %v1073
      %v1082 = vsel %vm1080, %v1067, %v1075
      %v1083 = vsel %vm1080, %v1069, %v1077
      %v1084 = vsel %vm1080, %v1071, %v1079
      %v1085 = vsel %vm1080, %v1073, %v1065
      %v1086 = vsel %vm1080, %v1075, %v1067
      %v1087 = vsel %vm1080, %v1077, %v1069
      %v1088 = vsel %vm1080, %v1079, %v1071
      %v1089 = vlaneseq
      %v1090 = vshrl.u32 %v1089, 7
      %v1091 = vsub.s32 3, %v1090
      %v1092 = vrot.slane %v836, %v1091
      %v1093 = vlaneseq
      %v1094 = vshrl.u32 %v1093, 7
      %v1095 = vsub.s32 7, %v1094
      %v1096 = vrot.slane %v836, %v1095
      %v1097 = vlaneseq
      %v1098 = vshrl.u32 %v1097, 7
      %v1099 = vsub.s32 3, %v1098
      %v1100 = vrot.slane %v1092, %v1099
      %v1101 = vlaneseq
      %v1102 = vshrl.u32 %v1101, 7
      %v1103 = vsub.s32 3, %v1102
      %v1104 = vrot.slane %v1096, %v1103
      %vm1105 = vcmp.eq.s32.totalorder %v1100, 1
      %vm1106 = vcmp.eq.s32.totalorder %v1104, 1
      %v1107 = vsel %vm1105, %v1056, %v1085
      %v1108 = vsel %vm1106, %v1057, %v1081
      %v1109 = vsel %vm1105, %v1058, %v1086
      %v1110 = vsel %vm1106, %v1059, %v1082
      %v1111 = vsel %vm1105, %v1060, %v1087
      %v1112 = vsel %vm1106, %v1061, %v1083
      %v1113 = vsel %vm1105, %v1062, %v1088
      %v1114 = vsel %vm1106, %v1063, %v1084
      %v1115 = vld [vmem:[%s5] sm:$0xff]
      %v1116 = vld [vmem:[%s5 + $0x8] sm:$0xff]
      %v1117 = vld [vmem:[%s5 + $0x10] sm:$0xff]
      %v1118 = vld [vmem:[%s5 + $0x18] sm:$0xff]
      %s1119 = scalar_lea.vmem %s5, 32
      %v1120 = vld [vmem:[%s1119] sm:$0xff]
      %v1121 = vld [vmem:[%s1119 + $0x8] sm:$0xff]
      %v1122 = vld [vmem:[%s1119 + $0x10] sm:$0xff]
      %v1123 = vld [vmem:[%s1119 + $0x18] sm:$0xff]
      %vm1124 = vcmask 261120
      %v1126 = vsel %vm1124, %v1120, 0
      %v1129 = vsel %vm1124, %v1121, 0
      %v1132 = vsel %vm1124, %v1122, 0
      %v1135 = vsel %vm1124, %v1123, 0
      %1137 = vmatprep.subr.mxu0 %v940
      %1138 = vmatpush1.msra.mxu0 %v939
      %1139 = vmatprep.subr.mxu0 %v942
      %1140 = vmatpush1.msra.mxu0 %v941
      %1141 = vmatprep.subr.mxu0 %v944
      %1142 = vmatpush1.msra.mxu0 %v943
      %1143 = vmatprep.subr.mxu0 %v946
      %1144 = vmatpush1.msra.mxu0 %v945
      %1145 = vmatprep.subr.mxu0 0.0
      %1146 = vmatpush1.msra.mxu0 0.0
      %1147 = vmatprep.subr.mxu0 0.0
      %1148 = vmatpush1.msra.mxu0 0.0
      %1149 = vmatprep.subr.mxu0 0.0
      %1150 = vmatpush1.msra.mxu0 0.0
      %1151 = vmatprep.subr.mxu0 0.0
      %1152 = vmatpush1.msra.mxu0 0.0
      %1153 = vmatprep.subr.mxu0 0.0
      %1154 = vmatpush1.msra.mxu0 0.0
      %1155 = vmatprep.subr.mxu0 0.0
      %1156 = vmatpush1.msra.mxu0 0.0
      %1157 = vmatprep.subr.mxu0 0.0
      %1158 = vmatpush1.msra.mxu0 0.0
      %1159 = vmatprep.subr.mxu0 0.0
      %1160 = vmatpush1.msra.mxu0 0.0
      %1161 = vmatprep.subr.mxu0 0.0
      %1162 = vmatpush1.msra.mxu0 0.0
      %1163 = vmatprep.subr.mxu0 0.0
      %1164 = vmatpush1.msra.mxu0 0.0
      %1165 = vmatprep.subr.mxu0 0.0
      %1166 = vmatpush1.msra.mxu0 0.0
      %1167 = vmatprep.subr.mxu0 0.0
      %1168 = vmatpush1.msra.mxu0 0.0
      %1169 = vmatprep.subr.mxu0 0.0
      %1170 = vmatpush1.msra.mxu0 0.0
      %1171 = vmatprep.subr.mxu0 0.0
      %1172 = vmatpush1.msra.mxu0 0.0
      %1173 = vmatprep.subr.mxu0 0.0
      %1174 = vmatpush1.msra.mxu0 0.0
      %1175 = vmatprep.subr.mxu0 0.0
      %1176 = vmatpush1.msra.mxu0 0.0
      %1177 = vmatprep.subr.mxu0 0.0
      %1178 = vmatpush1.msra.mxu0 0.0
      %1179 = vmatprep.subr.mxu0 0.0
      %1180 = vmatpush1.msra.mxu0 0.0
      %1181 = vmatprep.subr.mxu0 0.0
      %1182 = vmatpush1.msra.mxu0 0.0
      %1183 = vmatprep.subr.mxu0 0.0
      %1184 = vmatpush1.msra.mxu0 0.0
      %1185 = vmatprep.subr.mxu0 0.0
      %1186 = vmatpush1.msra.mxu0 0.0
      %1187 = vmatprep.subr.mxu0 0.0
      %1188 = vmatpush1.msra.mxu0 0.0
      %1189 = vmatprep.subr.mxu0 0.0
      %1190 = vmatpush1.msra.mxu0 0.0
      %1191 = vmatprep.subr.mxu0 0.0
      %1192 = vmatpush1.msra.mxu0 0.0
      %1193 = vmatprep.subr.mxu0 0.0
      %1194 = vmatpush1.msra.mxu0 0.0
      %1195 = vmatprep.subr.mxu0 0.0
      %1196 = vmatpush1.msra.mxu0 0.0
      %1197 = vmatprep.subr.mxu0 0.0
      %1198 = vmatpush1.msra.mxu0 0.0
      %1199 = vmatprep.subr.mxu0 0.0
      %1200 = vmatpush1.msra.mxu0 0.0
      %1201 = vmatprep.mubr.f32.mxu0 0.0
      %1202 = vmatmul.mubr.f32.gmra.mrb[0].mxu0 %v1126
      %v1203 = vpop.f32.mrb[0].mxu0
      %v1204 = vadd.f32 0.0, %v1203
      %v1205 = vpop.f32.mrb[0].mxu0
      %v1206 = vadd.f32 0.0, %v1205
      %1207 = vmatprep.mubr.f32.mxu0 0.0
      %1208 = vmatmul.mubr.f32.gmra.mrb[0].mxu0 %v1129
      %v1209 = vpop.f32.mrb[0].mxu0
      %v1210 = vadd.f32 0.0, %v1209
      %v1211 = vpop.f32.mrb[0].mxu0
      %v1212 = vadd.f32 0.0, %v1211
      %1213 = vmatprep.mubr.f32.mxu0 0.0
      %1214 = vmatmul.mubr.f32.gmra.mrb[0].mxu0 %v1132
      %v1215 = vpop.f32.mrb[0].mxu0
      %v1216 = vadd.f32 0.0, %v1215
      %v1217 = vpop.f32.mrb[0].mxu0
      %v1218 = vadd.f32 0.0, %v1217
      %1219 = vmatprep.mubr.f32.mxu0 0.0
      %1220 = vmatmul.mubr.f32.gmra.mrb[0].mxu0 %v1135
      %v1221 = vpop.f32.mrb[0].mxu0
      %v1222 = vadd.f32 0.0, %v1221
      %v1223 = vpop.f32.mrb[0].mxu0
      %v1224 = vadd.f32 0.0, %v1223
      %1225 = vdwg.mxu0
      %v1227 = vsel %vm1124, %v1115, 0
      %v1230 = vsel %vm1124, %v1116, 0
      %v1233 = vsel %vm1124, %v1117, 0
      %v1236 = vsel %vm1124, %v1118, 0
      %1238 = vmatprep.subr.mxu0 %v769
      %1239 = vmatpush1.msra.mxu0 %v768
      %1240 = vmatprep.subr.mxu0 %v771
      %1241 = vmatpush1.msra.mxu0 %v770
      %1242 = vmatprep.subr.mxu0 %v773
      %1243 = vmatpush1.msra.mxu0 %v772
      %1244 = vmatprep.subr.mxu0 %v775
      %1245 = vmatpush1.msra.mxu0 %v774
      %1246 = vmatprep.subr.mxu0 0.0
      %1247 = vmatpush1.msra.mxu0 0.0
      %1248 = vmatprep.subr.mxu0 0.0
      %1249 = vmatpush1.msra.mxu0 0.0
      %1250 = vmatprep.subr.mxu0 0.0
      %1251 = vmatpush1.msra.mxu0 0.0
      %1252 = vmatprep.subr.mxu0 0.0
      %1253 = vmatpush1.msra.mxu0 0.0
      %1254 = vmatprep.subr.mxu0 0.0
      %1255 = vmatpush1.msra.mxu0 0.0
      %1256 = vmatprep.subr.mxu0 0.0
      %1257 = vmatpush1.msra.mxu0 0.0
      %1258 = vmatprep.subr.mxu0 0.0
      %1259 = vmatpush1.msra.mxu0 0.0
      %1260 = vmatprep.subr.mxu0 0.0
      %1261 = vmatpush1.msra.mxu0 0.0
      %1262 = vmatprep.subr.mxu0 0.0
      %1263 = vmatpush1.msra.mxu0 0.0
      %1264 = vmatprep.subr.mxu0 0.0
      %1265 = vmatpush1.msra.mxu0 0.0
      %1266 = vmatprep.subr.mxu0 0.0
      %1267 = vmatpush1.msra.mxu0 0.0
      %1268 = vmatprep.subr.mxu0 0.0
      %1269 = vmatpush1.msra.mxu0 0.0
      %1270 = vmatprep.subr.mxu0 0.0
      %1271 = vmatpush1.msra.mxu0 0.0
      %1272 = vmatprep.subr.mxu0 0.0
      %1273 = vmatpush1.msra.mxu0 0.0
      %1274 = vmatprep.subr.mxu0 0.0
      %1275 = vmatpush1.msra.mxu0 0.0
      %1276 = vmatprep.subr.mxu0 0.0
      %1277 = vmatpush1.msra.mxu0 0.0
      %1278 = vmatprep.subr.mxu0 0.0
      %1279 = vmatpush1.msra.mxu0 0.0
      %1280 = vmatprep.subr.mxu0 0.0
      %1281 = vmatpush1.msra.mxu0 0.0
      %1282 = vmatprep.subr.mxu0 0.0
      %1283 = vmatpush1.msra.mxu0 0.0
      %1284 = vmatprep.subr.mxu0 0.0
      %1285 = vmatpush1.msra.mxu0 0.0
      %1286 = vmatprep.subr.mxu0 0.0
      %1287 = vmatpush1.msra.mxu0 0.0
      %1288 = vmatprep.subr.mxu0 0.0
      %1289 = vmatpush1.msra.mxu0 0.0
      %1290 = vmatprep.subr.mxu0 0.0
      %1291 = vmatpush1.msra.mxu0 0.0
      %1292 = vmatprep.subr.mxu0 0.0
      %1293 = vmatpush1.msra.mxu0 0.0
      %1294 = vmatprep.subr.mxu0 0.0
      %1295 = vmatpush1.msra.mxu0 0.0
      %1296 = vmatprep.subr.mxu0 0.0
      %1297 = vmatpush1.msra.mxu0 0.0
      %1298 = vmatprep.subr.mxu0 0.0
      %1299 = vmatpush1.msra.mxu0 0.0
      %1300 = vmatprep.subr.mxu0 0.0
      %1301 = vmatpush1.msra.mxu0 0.0
      %1302 = vmatprep.mubr.f32.mxu0 0.0
      %1303 = vmatmul.mubr.f32.gmra.mrb[0].mxu0 %v1227
      %v1304 = vpop.f32.mrb[0].mxu0
      %v1305 = vadd.f32 %v1204, %v1304
      %v1306 = vpop.f32.mrb[0].mxu0
      %v1307 = vadd.f32 %v1206, %v1306
      %1308 = vmatprep.mubr.f32.mxu0 0.0
      %1309 = vmatmul.mubr.f32.gmra.mrb[0].mxu0 %v1230
      %v1310 = vpop.f32.mrb[0].mxu0
      %v1311 = vadd.f32 %v1210, %v1310
      %v1312 = vpop.f32.mrb[0].mxu0
      %v1313 = vadd.f32 %v1212, %v1312
      %1314 = vmatprep.mubr.f32.mxu0 0.0
      %1315 = vmatmul.mubr.f32.gmra.mrb[0].mxu0 %v1233
      %v1316 = vpop.f32.mrb[0].mxu0
      %v1317 = vadd.f32 %v1216, %v1316
      %v1318 = vpop.f32.mrb[0].mxu0
      %v1319 = vadd.f32 %v1218, %v1318
      %1320 = vmatprep.mubr.f32.mxu0 0.0
      %1321 = vmatmul.mubr.f32.gmra.mrb[0].mxu0 %v1236
      %v1322 = vpop.f32.mrb[0].mxu0
      %v1323 = vadd.f32 %v1222, %v1322
      %v1324 = vpop.f32.mrb[0].mxu0
      %v1325 = vadd.f32 %v1224, %v1324
      %1326 = vdwg.mxu0
      %s1327 = scalar_lea.vmem %s5, 64
      %v1328 = vld [vmem:[%s1327] sm:$0xff]
      %v1329 = vld [vmem:[%s1327 + $0x8] sm:$0xff]
      %v1330 = vld [vmem:[%s1327 + $0x10] sm:$0xff]
      %v1331 = vld [vmem:[%s1327 + $0x18] sm:$0xff]
      %v1333 = vsel %vm1124, %v1328, 0
      %v1336 = vsel %vm1124, %v1329, 0
      %v1339 = vsel %vm1124, %v1330, 0
      %v1342 = vsel %vm1124, %v1331, 0
      %1344 = vmatprep.subr.mxu0 %v1108
      %1345 = vmatpush1.msra.mxu0 %v1107
      %1346 = vmatprep.subr.mxu0 %v1110
      %1347 = vmatpush1.msra.mxu0 %v1109
      %1348 = vmatprep.subr.mxu0 %v1112
      %1349 = vmatpush1.msra.mxu0 %v1111
      %1350 = vmatprep.subr.mxu0 %v1114
      %1351 = vmatpush1.msra.mxu0 %v1113
      %1352 = vmatprep.subr.mxu0 0.0
      %1353 = vmatpush1.msra.mxu0 0.0
      %1354 = vmatprep.subr.mxu0 0.0
      %1355 = vmatpush1.msra.mxu0 0.0
      %1356 = vmatprep.subr.mxu0 0.0
      %1357 = vmatpush1.msra.mxu0 0.0
      %1358 = vmatprep.subr.mxu0 0.0
      %1359 = vmatpush1.msra.mxu0 0.0
      %1360 = vmatprep.subr.mxu0 0.0
      %1361 = vmatpush1.msra.mxu0 0.0
      %1362 = vmatprep.subr.mxu0 0.0
      %1363 = vmatpush1.msra.mxu0 0.0
      %1364 = vmatprep.subr.mxu0 0.0
      %1365 = vmatpush1.msra.mxu0 0.0
      %1366 = vmatprep.subr.mxu0 0.0
      %1367 = vmatpush1.msra.mxu0 0.0
      %1368 = vmatprep.subr.mxu0 0.0
      %1369 = vmatpush1.msra.mxu0 0.0
      %1370 = vmatprep.subr.mxu0 0.0
      %1371 = vmatpush1.msra.mxu0 0.0
      %1372 = vmatprep.subr.mxu0 0.0
      %1373 = vmatpush1.msra.mxu0 0.0
      %1374 = vmatprep.subr.mxu0 0.0
      %1375 = vmatpush1.msra.mxu0 0.0
      %1376 = vmatprep.subr.mxu0 0.0
      %1377 = vmatpush1.msra.mxu0 0.0
      %1378 = vmatprep.subr.mxu0 0.0
      %1379 = vmatpush1.msra.mxu0 0.0
      %1380 = vmatprep.subr.mxu0 0.0
      %1381 = vmatpush1.msra.mxu0 0.0
      %1382 = vmatprep.subr.mxu0 0.0
      %1383 = vmatpush1.msra.mxu0 0.0
      %1384 = vmatprep.subr.mxu0 0.0
      %1385 = vmatpush1.msra.mxu0 0.0
      %1386 = vmatprep.subr.mxu0 0.0
      %1387 = vmatpush1.msra.mxu0 0.0
      %1388 = vmatprep.subr.mxu0 0.0
      %1389 = vmatpush1.msra.mxu0 0.0
      %1390 = vmatprep.subr.mxu0 0.0
      %1391 = vmatpush1.msra.mxu0 0.0
      %1392 = vmatprep.subr.mxu0 0.0
      %1393 = vmatpush1.msra.mxu0 0.0
      %1394 = vmatprep.subr.mxu0 0.0
      %1395 = vmatpush1.msra.mxu0 0.0
      %1396 = vmatprep.subr.mxu0 0.0
      %1397 = vmatpush1.msra.mxu0 0.0
      %1398 = vmatprep.subr.mxu0 0.0
      %1399 = vmatpush1.msra.mxu0 0.0
      %1400 = vmatprep.subr.mxu0 0.0
      %1401 = vmatpush1.msra.mxu0 0.0
      %1402 = vmatprep.subr.mxu0 0.0
      %1403 = vmatpush1.msra.mxu0 0.0
      %1404 = vmatprep.subr.mxu0 0.0
      %1405 = vmatpush1.msra.mxu0 0.0
      %1406 = vmatprep.subr.mxu0 0.0
      %1407 = vmatpush1.msra.mxu0 0.0
      %1408 = vmatprep.mubr.f32.mxu0 0.0
      %1409 = vmatmul.mubr.f32.gmra.mrb[0].mxu0 %v1333
      %v1410 = vpop.f32.mrb[0].mxu0
      %v1411 = vadd.f32 0.0, %v1410
      %v1412 = vpop.f32.mrb[0].mxu0
      %v1413 = vadd.f32 0.0, %v1412
      %1414 = vmatprep.mubr.f32.mxu0 0.0
      %1415 = vmatmul.mubr.f32.gmra.mrb[0].mxu0 %v1336
      %v1416 = vpop.f32.mrb[0].mxu0
      %v1417 = vadd.f32 0.0, %v1416
      %v1418 = vpop.f32.mrb[0].mxu0
      %v1419 = vadd.f32 0.0, %v1418
      %1420 = vmatprep.mubr.f32.mxu0 0.0
      %1421 = vmatmul.mubr.f32.gmra.mrb[0].mxu0 %v1339
      %v1422 = vpop.f32.mrb[0].mxu0
      %v1423 = vadd.f32 0.0, %v1422
      %v1424 = vpop.f32.mrb[0].mxu0
      %v1425 = vadd.f32 0.0, %v1424
      %1426 = vmatprep.mubr.f32.mxu0 0.0
      %1427 = vmatmul.mubr.f32.gmra.mrb[0].mxu0 %v1342
      %v1428 = vpop.f32.mrb[0].mxu0
      %v1429 = vadd.f32 0.0, %v1428
      %v1430 = vpop.f32.mrb[0].mxu0
      %v1431 = vadd.f32 0.0, %v1430
      %1432 = vdwg.mxu0
      %v1433 = vadd.f32 %v1305, %v1411
      %v1434 = vadd.f32 %v1307, %v1413
      %v1435 = vadd.f32 %v1311, %v1417
      %v1436 = vadd.f32 %v1313, %v1419
      %v1437 = vadd.f32 %v1317, %v1423
      %v1438 = vadd.f32 %v1319, %v1425
      %v1439 = vadd.f32 %v1323, %v1429
      %v1440 = vadd.f32 %v1325, %v1431
      %v1441 = vld [vmem:[%s6] sm:$0xff]
      %v1442 = vld [vmem:[%s6 + $0x8] sm:$0xff]
      %v1443 = vld [vmem:[%s6 + $0x10] sm:$0xff]
      %v1444 = vld [vmem:[%s6 + $0x18] sm:$0xff]
      %1446 = vset.pattern.permute.xlu0 0
      %1447 = vperm.xlu0 %1446, %v1441
      %v1448 = vpop.permute.xlu0 %1447
      %1451 = vset.pattern.permute.xlu0 0
      %1452 = vperm.xlu0 %1451, %v1442
      %v1453 = vpop.permute.xlu0 %1452
      %1456 = vset.pattern.permute.xlu0 0
      %1457 = vperm.xlu0 %1456, %v1443
      %v1458 = vpop.permute.xlu0 %1457
      %1461 = vset.pattern.permute.xlu0 0
      %1462 = vperm.xlu0 %1461, %v1444
      %v1463 = vpop.permute.xlu0 %1462
      %v1465 = vadd.f32 %v1433, %v1448
      %v1466 = vadd.f32 %v1434, %v1448
      %v1467 = vadd.f32 %v1435, %v1453
      %v1468 = vadd.f32 %v1436, %v1453
      %v1469 = vadd.f32 %v1437, %v1458
      %v1470 = vadd.f32 %v1438, %v1458
      %v1471 = vadd.f32 %v1439, %v1463
      %v1472 = vadd.f32 %v1440, %v1463
      %v1473 = vmax.f32 %v1465, 0.0
      %v1474 = vmax.f32 %v1466, 0.0
      %v1475 = vmax.f32 %v1467, 0.0
      %v1476 = vmax.f32 %v1468, 0.0
      %v1477 = vmax.f32 %v1469, 0.0
      %v1478 = vmax.f32 %v1470, 0.0
      %v1479 = vmax.f32 %v1471, 0.0
      %v1480 = vmax.f32 %v1472, 0.0
      %v1481 = vadd.f32 %v768, %v1473
      %v1482 = vadd.f32 %v769, %v1474
      %v1483 = vadd.f32 %v770, %v1475
      %v1484 = vadd.f32 %v771, %v1476
      %v1485 = vadd.f32 %v772, %v1477
      %v1486 = vadd.f32 %v773, %v1478
      %v1487 = vadd.f32 %v774, %v1479
      %v1488 = vadd.f32 %v775, %v1480
      %v1489 = vld [vmem:[%s7] sm:$0xff]
      %v1490 = vld [vmem:[%s7 + $0x8] sm:$0xff]
      %v1491 = vld [vmem:[%s7 + $0x10] sm:$0xff]
      %v1492 = vld [vmem:[%s8] sm:$0xff]
      %v1493 = vld [vmem:[%s8 + $0x8] sm:$0xff]
      %v1494 = vld [vmem:[%s8 + $0x10] sm:$0xff]
      %1496 = vset.pattern.permute.xlu0 0
      %1497 = vperm.xlu0 %1496, %v1492
      %v1498 = vpop.permute.xlu0 %1497
      %1501 = vset.pattern.permute.xlu0 0
      %1502 = vperm.xlu0 %1501, %v1493
      %v1503 = vpop.permute.xlu0 %1502
      %1506 = vset.pattern.permute.xlu0 0
      %1507 = vperm.xlu0 %1506, %v1494
      %v1508 = vpop.permute.xlu0 %1507
      %v1511 = vsel %vm1124, %v1489, 0
      %v1514 = vsel %vm1124, %v1490, 0
      %v1517 = vsel %vm1124, %v1491, 0
      %1519 = vmatprep.subr.mxu0 %v1482
      %1520 = vmatpush1.msra.mxu0 %v1481
      %1521 = vmatprep.subr.mxu0 %v1484
      %1522 = vmatpush1.msra.mxu0 %v1483
      %1523 = vmatprep.subr.mxu0 %v1486
      %1524 = vmatpush1.msra.mxu0 %v1485
      %1525 = vmatprep.subr.mxu0 %v1488
      %1526 = vmatpush1.msra.mxu0 %v1487
      %1527 = vmatprep.subr.mxu0 0.0
      %1528 = vmatpush1.msra.mxu0 0.0
      %1529 = vmatprep.subr.mxu0 0.0
      %1530 = vmatpush1.msra.mxu0 0.0
      %1531 = vmatprep.subr.mxu0 0.0
      %1532 = vmatpush1.msra.mxu0 0.0
      %1533 = vmatprep.subr.mxu0 0.0
      %1534 = vmatpush1.msra.mxu0 0.0
      %1535 = vmatprep.subr.mxu0 0.0
      %1536 = vmatpush1.msra.mxu0 0.0
      %1537 = vmatprep.subr.mxu0 0.0
      %1538 = vmatpush1.msra.mxu0 0.0
      %1539 = vmatprep.subr.mxu0 0.0
      %1540 = vmatpush1.msra.mxu0 0.0
      %1541 = vmatprep.subr.mxu0 0.0
      %1542 = vmatpush1.msra.mxu0 0.0
      %1543 = vmatprep.subr.mxu0 0.0
      %1544 = vmatpush1.msra.mxu0 0.0
      %1545 = vmatprep.subr.mxu0 0.0
      %1546 = vmatpush1.msra.mxu0 0.0
      %1547 = vmatprep.subr.mxu0 0.0
      %1548 = vmatpush1.msra.mxu0 0.0
      %1549 = vmatprep.subr.mxu0 0.0
      %1550 = vmatpush1.msra.mxu0 0.0
      %1551 = vmatprep.subr.mxu0 0.0
      %1552 = vmatpush1.msra.mxu0 0.0
      %1553 = vmatprep.subr.mxu0 0.0
      %1554 = vmatpush1.msra.mxu0 0.0
      %1555 = vmatprep.subr.mxu0 0.0
      %1556 = vmatpush1.msra.mxu0 0.0
      %1557 = vmatprep.subr.mxu0 0.0
      %1558 = vmatpush1.msra.mxu0 0.0
      %1559 = vmatprep.subr.mxu0 0.0
      %1560 = vmatpush1.msra.mxu0 0.0
      %1561 = vmatprep.subr.mxu0 0.0
      %1562 = vmatpush1.msra.mxu0 0.0
      %1563 = vmatprep.subr.mxu0 0.0
      %1564 = vmatpush1.msra.mxu0 0.0
      %1565 = vmatprep.subr.mxu0 0.0
      %1566 = vmatpush1.msra.mxu0 0.0
      %1567 = vmatprep.subr.mxu0 0.0
      %1568 = vmatpush1.msra.mxu0 0.0
      %1569 = vmatprep.subr.mxu0 0.0
      %1570 = vmatpush1.msra.mxu0 0.0
      %1571 = vmatprep.subr.mxu0 0.0
      %1572 = vmatpush1.msra.mxu0 0.0
      %1573 = vmatprep.subr.mxu0 0.0
      %1574 = vmatpush1.msra.mxu0 0.0
      %1575 = vmatprep.subr.mxu0 0.0
      %1576 = vmatpush1.msra.mxu0 0.0
      %1577 = vmatprep.subr.mxu0 0.0
      %1578 = vmatpush1.msra.mxu0 0.0
      %1579 = vmatprep.subr.mxu0 0.0
      %1580 = vmatpush1.msra.mxu0 0.0
      %1581 = vmatprep.subr.mxu0 0.0
      %1582 = vmatpush1.msra.mxu0 0.0
      %1583 = vmatprep.mubr.f32.mxu0 0.0
      %1584 = vmatmul.mubr.f32.gmra.mrb[0].mxu0 %v1511
      %v1585 = vpop.f32.mrb[0].mxu0
      %v1586 = vadd.f32 %v1498, %v1585
      %v1587 = vpop.f32.mrb[0].mxu0
      %v1588 = vadd.f32 %v1498, %v1587
      %1589 = vmatprep.mubr.f32.mxu0 0.0
      %1590 = vmatmul.mubr.f32.gmra.mrb[0].mxu0 %v1514
      %v1591 = vpop.f32.mrb[0].mxu0
      %v1592 = vadd.f32 %v1503, %v1591
      %v1593 = vpop.f32.mrb[0].mxu0
      %v1594 = vadd.f32 %v1503, %v1593
      %1595 = vmatprep.mubr.f32.mxu0 0.0
      %1596 = vmatmul.mubr.f32.gmra.mrb[0].mxu0 %v1517
      %v1597 = vpop.f32.mrb[0].mxu0
      %v1598 = vadd.f32 %v1508, %v1597
      %v1599 = vpop.f32.mrb[0].mxu0
      %v1600 = vadd.f32 %v1508, %v1599
      %1601 = vdwg.mxu0
      %v1602 = vxor.u32 %v1586, 2147483648
      %v1603 = vxor.u32 %v1588, 2147483648
      %v1604 = vxor.u32 %v1592, 2147483648
      %v1605 = vxor.u32 %v1594, 2147483648
      %v1606 = vxor.u32 %v1598, 2147483648
      %v1607 = vxor.u32 %v1600, 2147483648
      %v1608 = vmul.f32 %v1602, 1.442695
      %v1609 = vpow.pop %v1608
      %v1610 = vmul.f32 %v1603, 1.442695
      %v1611 = vpow.pop %v1610
      %v1612 = vmul.f32 %v1604, 1.442695
      %v1613 = vpow.pop %v1612
      %v1614 = vmul.f32 %v1605, 1.442695
      %v1615 = vpow.pop %v1614
      %v1616 = vmul.f32 %v1606, 1.442695
      %v1617 = vpow.pop %v1616
      %v1618 = vmul.f32 %v1607, 1.442695
      %v1619 = vpow.pop %v1618
      %v1620 = vadd.f32 %v1609, 1.0
      %v1621 = vadd.f32 %v1611, 1.0
      %v1622 = vadd.f32 %v1613, 1.0
      %v1623 = vadd.f32 %v1615, 1.0
      %v1624 = vadd.f32 %v1617, 1.0
      %v1625 = vadd.f32 %v1619, 1.0
      %v1626 = vrcp.pop %v1620
      %v1627 = vmul.f32 1.0, %v1626
      %v1628 = vrcp.pop %v1621
      %v1629 = vmul.f32 1.0, %v1628
      %v1630 = vrcp.pop %v1622
      %v1631 = vmul.f32 1.0, %v1630
      %v1632 = vrcp.pop %v1623
      %v1633 = vmul.f32 1.0, %v1632
      %v1634 = vrcp.pop %v1624
      %v1635 = vmul.f32 1.0, %v1634
      %v1636 = vrcp.pop %v1625
      %v1637 = vmul.f32 1.0, %v1636
      %v1638 = vmul.f32 %v1481, %v1627
      %v1639 = vmul.f32 %v1482, %v1629
      %v1640 = vmul.f32 %v1483, %v1631
      %v1641 = vmul.f32 %v1484, %v1633
      %v1642 = vmul.f32 %v1485, %v1635
      %v1643 = vmul.f32 %v1486, %v1637
      %v1644 = vadd.f32 %v774, %v1638
      %v1645 = vadd.f32 %v775, %v1639
      %v1646 = vadd.f32 %v1644, %v1640
      %v1647 = vadd.f32 %v1645, %v1641
      %v1648 = vadd.f32 %v1646, %v1642
      %v1649 = vadd.f32 %v1647, %v1643
      %1650 = vrot.lane.b32.xlu0 %v1648, 127
      %v1651 = vpop.permute.xlu0 %1650
      %1652 = vrot.lane.b32.xlu0 %v1649, 127
      %v1653 = vpop.permute.xlu0 %1652
      %v1654 = vsel %vm794, %v1651, %v1653
      %v1655 = vsel %vm794, %v1653, %v1651
      %v1656 = vmax.f32 %v1648, %v1654
      %v1657 = vmax.f32 %v1649, %v1655
      %1658 = vrot.lane.b32.xlu0 %v1656, 1
      %v1659 = vpop.permute.xlu0 %1658
      %1660 = vrot.lane.b32.xlu0 %v1657, 1
      %v1661 = vpop.permute.xlu0 %1660
      %v1662 = vsel %vm827, %v1659, %v1661
      %v1663 = vsel %vm827, %v1661, %v1659
      %v1664 = vsel %vm853, %v1656, %v1663
      %v1665 = vsel %vm854, %v1657, %v1662
      %1666 = vrot.lane.b32.xlu0 %v1664, 112
      %v1667 = vpop.permute.xlu0 %1666
      %1668 = vrot.lane.b32.xlu0 %v1665, 112
      %v1669 = vpop.permute.xlu0 %1668
      %v1670 = vsel %vm879, %v1667, %v1669
      %v1671 = vsel %vm879, %v1669, %v1667
      %v1672 = vmax.f32 %v1664, %v1670
      %v1673 = vmax.f32 %v1665, %v1671
      %1674 = vrot.lane.b32.xlu0 %v1672, 16
      %v1675 = vpop.permute.xlu0 %1674
      %1676 = vrot.lane.b32.xlu0 %v1673, 16
      %v1677 = vpop.permute.xlu0 %1676
      %v1678 = vsel %vm912, %v1675, %v1677
      %v1679 = vsel %vm912, %v1677, %v1675
      %v1680 = vsel %vm937, %v1672, %v1679
      %v1681 = vsel %vm938, %v1673, %v1678
      %1682 = vrot.lane.b32.xlu0 %v1680, 126
      %v1683 = vpop.permute.xlu0 %1682
      %1684 = vrot.lane.b32.xlu0 %v1681, 126
      %v1685 = vpop.permute.xlu0 %1684
      %v1686 = vsel %vm963, %v1683, %v1685
      %v1687 = vsel %vm963, %v1685, %v1683
      %v1688 = vmax.f32 %v1680, %v1686
      %v1689 = vmax.f32 %v1681, %v1687
      %1690 = vrot.lane.b32.xlu0 %v1688, 2
      %v1691 = vpop.permute.xlu0 %1690
      %1692 = vrot.lane.b32.xlu0 %v1689, 2
      %v1693 = vpop.permute.xlu0 %1692
      %v1694 = vsel %vm996, %v1691, %v1693
      %v1695 = vsel %vm996, %v1693, %v1691
      %v1696 = vsel %vm1021, %v1688, %v1695
      %v1697 = vsel %vm1022, %v1689, %v1694
      %1698 = vrot.lane.b32.xlu0 %v1696, 96
      %v1699 = vpop.permute.xlu0 %1698
      %1700 = vrot.lane.b32.xlu0 %v1697, 96
      %v1701 = vpop.permute.xlu0 %1700
      %v1702 = vsel %vm1047, %v1699, %v1701
      %v1703 = vsel %vm1047, %v1701, %v1699
      %v1704 = vmax.f32 %v1696, %v1702
      %v1705 = vmax.f32 %v1697, %v1703
      %1706 = vrot.lane.b32.xlu0 %v1704, 32
      %v1707 = vpop.permute.xlu0 %1706
      %1708 = vrot.lane.b32.xlu0 %v1705, 32
      %v1709 = vpop.permute.xlu0 %1708
      %v1710 = vsel %vm1080, %v1707, %v1709
      %v1711 = vsel %vm1080, %v1709, %v1707
      %v1712 = vsel %vm1105, %v1704, %v1711
      %v1713 = vsel %vm1106, %v1705, %v1710
      %v1714 = vld [vmem:[%s9] sm:$0xff]
      %s1715 = scalar_lea.vmem %s9, 8
      %v1716 = vld [vmem:[%s1715] sm:$0xff]
      %vm1717 = vcmask 64512
      %v1719 = vsel %vm1717, %v1716, 0
      %1721 = vmatprep.subr.mxu0 %v1681
      %1722 = vmatpush1.msra.mxu0 %v1680
      %1723 = vmatprep.subr.mxu0 0.0
      %1724 = vmatpush1.msra.mxu0 0.0
      %1725 = vmatprep.subr.mxu0 0.0
      %1726 = vmatpush1.msra.mxu0 0.0
      %1727 = vmatprep.subr.mxu0 0.0
      %1728 = vmatpush1.msra.mxu0 0.0
      %1729 = vmatprep.subr.mxu0 0.0
      %1730 = vmatpush1.msra.mxu0 0.0
      %1731 = vmatprep.subr.mxu0 0.0
      %1732 = vmatpush1.msra.mxu0 0.0
      %1733 = vmatprep.subr.mxu0 0.0
      %1734 = vmatpush1.msra.mxu0 0.0
      %1735 = vmatprep.subr.mxu0 0.0
      %1736 = vmatpush1.msra.mxu0 0.0
      %1737 = vmatprep.subr.mxu0 0.0
      %1738 = vmatpush1.msra.mxu0 0.0
      %1739 = vmatprep.subr.mxu0 0.0
      %1740 = vmatpush1.msra.mxu0 0.0
      %1741 = vmatprep.subr.mxu0 0.0
      %1742 = vmatpush1.msra.mxu0 0.0
      %1743 = vmatprep.subr.mxu0 0.0
      %1744 = vmatpush1.msra.mxu0 0.0
      %1745 = vmatprep.subr.mxu0 0.0
      %1746 = vmatpush1.msra.mxu0 0.0
      %1747 = vmatprep.subr.mxu0 0.0
      %1748 = vmatpush1.msra.mxu0 0.0
      %1749 = vmatprep.subr.mxu0 0.0
      %1750 = vmatpush1.msra.mxu0 0.0
      %1751 = vmatprep.subr.mxu0 0.0
      %1752 = vmatpush1.msra.mxu0 0.0
      %1753 = vmatprep.subr.mxu0 0.0
      %1754 = vmatpush1.msra.mxu0 0.0
      %1755 = vmatprep.subr.mxu0 0.0
      %1756 = vmatpush1.msra.mxu0 0.0
      %1757 = vmatprep.subr.mxu0 0.0
      %1758 = vmatpush1.msra.mxu0 0.0
      %1759 = vmatprep.subr.mxu0 0.0
      %1760 = vmatpush1.msra.mxu0 0.0
      %1761 = vmatprep.subr.mxu0 0.0
      %1762 = vmatpush1.msra.mxu0 0.0
      %1763 = vmatprep.subr.mxu0 0.0
      %1764 = vmatpush1.msra.mxu0 0.0
      %1765 = vmatprep.subr.mxu0 0.0
      %1766 = vmatpush1.msra.mxu0 0.0
      %1767 = vmatprep.subr.mxu0 0.0
      %1768 = vmatpush1.msra.mxu0 0.0
      %1769 = vmatprep.subr.mxu0 0.0
      %1770 = vmatpush1.msra.mxu0 0.0
      %1771 = vmatprep.subr.mxu0 0.0
      %1772 = vmatpush1.msra.mxu0 0.0
      %1773 = vmatprep.subr.mxu0 0.0
      %1774 = vmatpush1.msra.mxu0 0.0
      %1775 = vmatprep.subr.mxu0 0.0
      %1776 = vmatpush1.msra.mxu0 0.0
      %1777 = vmatprep.subr.mxu0 0.0
      %1778 = vmatpush1.msra.mxu0 0.0
      %1779 = vmatprep.subr.mxu0 0.0
      %1780 = vmatpush1.msra.mxu0 0.0
      %1781 = vmatprep.subr.mxu0 0.0
      %1782 = vmatpush1.msra.mxu0 0.0
      %1783 = vmatprep.subr.mxu0 0.0
      %1784 = vmatpush1.msra.mxu0 0.0
      %1785 = vmatprep.mubr.f32.mxu0 0.0
      %1786 = vmatmul.mubr.f32.gmra.mrb[0].mxu0 %v1719
      %v1787 = vpop.f32.mrb[0].mxu0
      %v1788 = vadd.f32 0.0, %v1787
      %v1789 = vpop.f32.mrb[0].mxu0
      %v1790 = vadd.f32 0.0, %v1789
      %1791 = vdwg.mxu0
      %v1793 = vsel %vm1717, %v1714, 0
      %1795 = vmatprep.subr.mxu0 %v1649
      %1796 = vmatpush1.msra.mxu0 %v1648
      %1797 = vmatprep.subr.mxu0 0.0
      %1798 = vmatpush1.msra.mxu0 0.0
      %1799 = vmatprep.subr.mxu0 0.0
      %1800 = vmatpush1.msra.mxu0 0.0
      %1801 = vmatprep.subr.mxu0 0.0
      %1802 = vmatpush1.msra.mxu0 0.0
      %1803 = vmatprep.subr.mxu0 0.0
      %1804 = vmatpush1.msra.mxu0 0.0
      %1805 = vmatprep.subr.mxu0 0.0
      %1806 = vmatpush1.msra.mxu0 0.0
      %1807 = vmatprep.subr.mxu0 0.0
      %1808 = vmatpush1.msra.mxu0 0.0
      %1809 = vmatprep.subr.mxu0 0.0
      %1810 = vmatpush1.msra.mxu0 0.0
      %1811 = vmatprep.subr.mxu0 0.0
      %1812 = vmatpush1.msra.mxu0 0.0
      %1813 = vmatprep.subr.mxu0 0.0
      %1814 = vmatpush1.msra.mxu0 0.0
      %1815 = vmatprep.subr.mxu0 0.0
      %1816 = vmatpush1.msra.mxu0 0.0
      %1817 = vmatprep.subr.mxu0 0.0
      %1818 = vmatpush1.msra.mxu0 0.0
      %1819 = vmatprep.subr.mxu0 0.0
      %1820 = vmatpush1.msra.mxu0 0.0
      %1821 = vmatprep.subr.mxu0 0.0
      %1822 = vmatpush1.msra.mxu0 0.0
      %1823 = vmatprep.subr.mxu0 0.0
      %1824 = vmatpush1.msra.mxu0 0.0
      %1825 = vmatprep.subr.mxu0 0.0
      %1826 = vmatpush1.msra.mxu0 0.0
      %1827 = vmatprep.subr.mxu0 0.0
      %1828 = vmatpush1.msra.mxu0 0.0
      %1829 = vmatprep.subr.mxu0 0.0
      %1830 = vmatpush1.msra.mxu0 0.0
      %1831 = vmatprep.subr.mxu0 0.0
      %1832 = vmatpush1.msra.mxu0 0.0
      %1833 = vmatprep.subr.mxu0 0.0
      %1834 = vmatpush1.msra.mxu0 0.0
      %1835 = vmatprep.subr.mxu0 0.0
      %1836 = vmatpush1.msra.mxu0 0.0
      %1837 = vmatprep.subr.mxu0 0.0
      %1838 = vmatpush1.msra.mxu0 0.0
      %1839 = vmatprep.subr.mxu0 0.0
      %1840 = vmatpush1.msra.mxu0 0.0
      %1841 = vmatprep.subr.mxu0 0.0
      %1842 = vmatpush1.msra.mxu0 0.0
      %1843 = vmatprep.subr.mxu0 0.0
      %1844 = vmatpush1.msra.mxu0 0.0
      %1845 = vmatprep.subr.mxu0 0.0
      %1846 = vmatpush1.msra.mxu0 0.0
      %1847 = vmatprep.subr.mxu0 0.0
      %1848 = vmatpush1.msra.mxu0 0.0
      %1849 = vmatprep.subr.mxu0 0.0
      %1850 = vmatpush1.msra.mxu0 0.0
      %1851 = vmatprep.subr.mxu0 0.0
      %1852 = vmatpush1.msra.mxu0 0.0
      %1853 = vmatprep.subr.mxu0 0.0
      %1854 = vmatpush1.msra.mxu0 0.0
      %1855 = vmatprep.subr.mxu0 0.0
      %1856 = vmatpush1.msra.mxu0 0.0
      %1857 = vmatprep.subr.mxu0 0.0
      %1858 = vmatpush1.msra.mxu0 0.0
      %1859 = vmatprep.mubr.f32.mxu0 0.0
      %1860 = vmatmul.mubr.f32.gmra.mrb[0].mxu0 %v1793
      %v1861 = vpop.f32.mrb[0].mxu0
      %v1862 = vadd.f32 %v1788, %v1861
      %v1863 = vpop.f32.mrb[0].mxu0
      %v1864 = vadd.f32 %v1790, %v1863
      %1865 = vdwg.mxu0
      %s1866 = scalar_lea.vmem %s9, 16
      %v1867 = vld [vmem:[%s1866] sm:$0xff]
      %v1869 = vsel %vm1717, %v1867, 0
      %1871 = vmatprep.subr.mxu0 %v1713
      %1872 = vmatpush1.msra.mxu0 %v1712
      %1873 = vmatprep.subr.mxu0 0.0
      %1874 = vmatpush1.msra.mxu0 0.0
      %1875 = vmatprep.subr.mxu0 0.0
      %1876 = vmatpush1.msra.mxu0 0.0
      %1877 = vmatprep.subr.mxu0 0.0
      %1878 = vmatpush1.msra.mxu0 0.0
      %1879 = vmatprep.subr.mxu0 0.0
      %1880 = vmatpush1.msra.mxu0 0.0
      %1881 = vmatprep.subr.mxu0 0.0
      %1882 = vmatpush1.msra.mxu0 0.0
      %1883 = vmatprep.subr.mxu0 0.0
      %1884 = vmatpush1.msra.mxu0 0.0
      %1885 = vmatprep.subr.mxu0 0.0
      %1886 = vmatpush1.msra.mxu0 0.0
      %1887 = vmatprep.subr.mxu0 0.0
      %1888 = vmatpush1.msra.mxu0 0.0
      %1889 = vmatprep.subr.mxu0 0.0
      %1890 = vmatpush1.msra.mxu0 0.0
      %1891 = vmatprep.subr.mxu0 0.0
      %1892 = vmatpush1.msra.mxu0 0.0
      %1893 = vmatprep.subr.mxu0 0.0
      %1894 = vmatpush1.msra.mxu0 0.0
      %1895 = vmatprep.subr.mxu0 0.0
      %1896 = vmatpush1.msra.mxu0 0.0
      %1897 = vmatprep.subr.mxu0 0.0
      %1898 = vmatpush1.msra.mxu0 0.0
      %1899 = vmatprep.subr.mxu0 0.0
      %1900 = vmatpush1.msra.mxu0 0.0
      %1901 = vmatprep.subr.mxu0 0.0
      %1902 = vmatpush1.msra.mxu0 0.0
      %1903 = vmatprep.subr.mxu0 0.0
      %1904 = vmatpush1.msra.mxu0 0.0
      %1905 = vmatprep.subr.mxu0 0.0
      %1906 = vmatpush1.msra.mxu0 0.0
      %1907 = vmatprep.subr.mxu0 0.0
      %1908 = vmatpush1.msra.mxu0 0.0
      %1909 = vmatprep.subr.mxu0 0.0
      %1910 = vmatpush1.msra.mxu0 0.0
      %1911 = vmatprep.subr.mxu0 0.0
      %1912 = vmatpush1.msra.mxu0 0.0
      %1913 = vmatprep.subr.mxu0 0.0
      %1914 = vmatpush1.msra.mxu0 0.0
      %1915 = vmatprep.subr.mxu0 0.0
      %1916 = vmatpush1.msra.mxu0 0.0
      %1917 = vmatprep.subr.mxu0 0.0
      %1918 = vmatpush1.msra.mxu0 0.0
      %1919 = vmatprep.subr.mxu0 0.0
      %1920 = vmatpush1.msra.mxu0 0.0
      %1921 = vmatprep.subr.mxu0 0.0
      %1922 = vmatpush1.msra.mxu0 0.0
      %1923 = vmatprep.subr.mxu0 0.0
      %1924 = vmatpush1.msra.mxu0 0.0
      %1925 = vmatprep.subr.mxu0 0.0
      %1926 = vmatpush1.msra.mxu0 0.0
      %1927 = vmatprep.subr.mxu0 0.0
      %1928 = vmatpush1.msra.mxu0 0.0
      %1929 = vmatprep.subr.mxu0 0.0
      %1930 = vmatpush1.msra.mxu0 0.0
      %1931 = vmatprep.subr.mxu0 0.0
      %1932 = vmatpush1.msra.mxu0 0.0
      %1933 = vmatprep.subr.mxu0 0.0
      %1934 = vmatpush1.msra.mxu0 0.0
      %1935 = vmatprep.mubr.f32.mxu0 0.0
      %1936 = vmatmul.mubr.f32.gmra.mrb[0].mxu0 %v1869
      %v1937 = vpop.f32.mrb[0].mxu0
      %v1938 = vadd.f32 0.0, %v1937
      %v1939 = vpop.f32.mrb[0].mxu0
      %v1940 = vadd.f32 0.0, %v1939
      %1941 = vdwg.mxu0
      %v1942 = vadd.f32 %v1862, %v1938
      %v1943 = vadd.f32 %v1864, %v1940
      %v1944 = vld [vmem:[%s10] sm:$0xff]
      %1946 = vset.pattern.permute.xlu0 0
      %1947 = vperm.xlu0 %1946, %v1944
      %v1948 = vpop.permute.xlu0 %1947
      %v1950 = vadd.f32 %v1942, %v1948
      %v1951 = vadd.f32 %v1943, %v1948
      %v1952 = vmax.f32 %v1950, 0.0
      %v1953 = vmax.f32 %v1951, 0.0
      %v1954 = vadd.f32 %v1648, %v1952
      %v1955 = vadd.f32 %v1649, %v1953
      %v1956 = vld [vmem:[%s11] sm:$0xff]
      %v1957 = vld [vmem:[%s11 + $0x8] sm:$0xff]
      %v1958 = vld [vmem:[%s11 + $0x10] sm:$0xff]
      %v1959 = vld [vmem:[%s12] sm:$0xff]
      %v1960 = vld [vmem:[%s12 + $0x8] sm:$0xff]
      %v1961 = vld [vmem:[%s12 + $0x10] sm:$0xff]
      %vm1962 = vcmask 195584
      %v1964 = vsel %vm1962, %v1959, 0
      %v1967 = vsel %vm1962, %v1960, 0
      %v1970 = vsel %vm1962, %v1961, 0
      %1972 = vmatprep.subr.mxu0 %v1482
      %1973 = vmatpush1.msra.mxu0 %v1481
      %1974 = vmatprep.subr.mxu0 %v1484
      %1975 = vmatpush1.msra.mxu0 %v1483
      %1976 = vmatprep.subr.mxu0 %v1486
      %1977 = vmatpush1.msra.mxu0 %v1485
      %1978 = vmatprep.subr.mxu0 0.0
      %1979 = vmatpush1.msra.mxu0 0.0
      %1980 = vmatprep.subr.mxu0 0.0
      %1981 = vmatpush1.msra.mxu0 0.0
      %1982 = vmatprep.subr.mxu0 0.0
      %1983 = vmatpush1.msra.mxu0 0.0
      %1984 = vmatprep.subr.mxu0 0.0
      %1985 = vmatpush1.msra.mxu0 0.0
      %1986 = vmatprep.subr.mxu0 0.0
      %1987 = vmatpush1.msra.mxu0 0.0
      %1988 = vmatprep.subr.mxu0 0.0
      %1989 = vmatpush1.msra.mxu0 0.0
      %1990 = vmatprep.subr.mxu0 0.0
      %1991 = vmatpush1.msra.mxu0 0.0
      %1992 = vmatprep.subr.mxu0 0.0
      %1993 = vmatpush1.msra.mxu0 0.0
      %1994 = vmatprep.subr.mxu0 0.0
      %1995 = vmatpush1.msra.mxu0 0.0
      %1996 = vmatprep.subr.mxu0 0.0
      %1997 = vmatpush1.msra.mxu0 0.0
      %1998 = vmatprep.subr.mxu0 0.0
      %1999 = vmatpush1.msra.mxu0 0.0
      %2000 = vmatprep.subr.mxu0 0.0
      %2001 = vmatpush1.msra.mxu0 0.0
      %2002 = vmatprep.subr.mxu0 0.0
      %2003 = vmatpush1.msra.mxu0 0.0
      %2004 = vmatprep.subr.mxu0 0.0
      %2005 = vmatpush1.msra.mxu0 0.0
      %2006 = vmatprep.subr.mxu0 0.0
      %2007 = vmatpush1.msra.mxu0 0.0
      %2008 = vmatprep.subr.mxu0 0.0
      %2009 = vmatpush1.msra.mxu0 0.0
      %2010 = vmatprep.subr.mxu0 0.0
      %2011 = vmatpush1.msra.mxu0 0.0
      %2012 = vmatprep.subr.mxu0 0.0
      %2013 = vmatpush1.msra.mxu0 0.0
      %2014 = vmatprep.subr.mxu0 0.0
      %2015 = vmatpush1.msra.mxu0 0.0
      %2016 = vmatprep.subr.mxu0 0.0
      %2017 = vmatpush1.msra.mxu0 0.0
      %2018 = vmatprep.subr.mxu0 0.0
      %2019 = vmatpush1.msra.mxu0 0.0
      %2020 = vmatprep.subr.mxu0 0.0
      %2021 = vmatpush1.msra.mxu0 0.0
      %2022 = vmatprep.subr.mxu0 0.0
      %2023 = vmatpush1.msra.mxu0 0.0
      %2024 = vmatprep.subr.mxu0 0.0
      %2025 = vmatpush1.msra.mxu0 0.0
      %2026 = vmatprep.subr.mxu0 0.0
      %2027 = vmatpush1.msra.mxu0 0.0
      %2028 = vmatprep.subr.mxu0 0.0
      %2029 = vmatpush1.msra.mxu0 0.0
      %2030 = vmatprep.subr.mxu0 0.0
      %2031 = vmatpush1.msra.mxu0 0.0
      %2032 = vmatprep.subr.mxu0 0.0
      %2033 = vmatpush1.msra.mxu0 0.0
      %2034 = vmatprep.subr.mxu0 0.0
      %2035 = vmatpush1.msra.mxu0 0.0
      %2036 = vmatprep.mubr.f32.mxu0 0.0
      %2037 = vmatmul.mubr.f32.gmra.mrb[0].mxu0 %v1964
      %v2038 = vpop.f32.mrb[0].mxu0
      %v2039 = vadd.f32 0.0, %v2038
      %v2040 = vpop.f32.mrb[0].mxu0
      %v2041 = vadd.f32 0.0, %v2040
      %2042 = vmatprep.mubr.f32.mxu0 0.0
      %2043 = vmatmul.mubr.f32.gmra.mrb[0].mxu0 %v1967
      %v2044 = vpop.f32.mrb[0].mxu0
      %v2045 = vadd.f32 0.0, %v2044
      %v2046 = vpop.f32.mrb[0].mxu0
      %v2047 = vadd.f32 0.0, %v2046
      %2048 = vmatprep.mubr.f32.mxu0 0.0
      %2049 = vmatmul.mubr.f32.gmra.mrb[0].mxu0 %v1970
      %v2050 = vpop.f32.mrb[0].mxu0
      %v2051 = vadd.f32 0.0, %v2050
      %v2052 = vpop.f32.mrb[0].mxu0
      %v2053 = vadd.f32 0.0, %v2052
      %2054 = vdwg.mxu0
      %v2056 = vsel %vm1717, %v1956, 0
      %v2059 = vsel %vm1717, %v1957, 0
      %v2062 = vsel %vm1717, %v1958, 0
      %2064 = vmatprep.subr.mxu0 %v1955
      %2065 = vmatpush1.msra.mxu0 %v1954
      %2066 = vmatprep.subr.mxu0 0.0
      %2067 = vmatpush1.msra.mxu0 0.0
      %2068 = vmatprep.subr.mxu0 0.0
      %2069 = vmatpush1.msra.mxu0 0.0
      %2070 = vmatprep.subr.mxu0 0.0
      %2071 = vmatpush1.msra.mxu0 0.0
      %2072 = vmatprep.subr.mxu0 0.0
      %2073 = vmatpush1.msra.mxu0 0.0
      %2074 = vmatprep.subr.mxu0 0.0
      %2075 = vmatpush1.msra.mxu0 0.0
      %2076 = vmatprep.subr.mxu0 0.0
      %2077 = vmatpush1.msra.mxu0 0.0
      %2078 = vmatprep.subr.mxu0 0.0
      %2079 = vmatpush1.msra.mxu0 0.0
      %2080 = vmatprep.subr.mxu0 0.0
      %2081 = vmatpush1.msra.mxu0 0.0
      %2082 = vmatprep.subr.mxu0 0.0
      %2083 = vmatpush1.msra.mxu0 0.0
      %2084 = vmatprep.subr.mxu0 0.0
      %2085 = vmatpush1.msra.mxu0 0.0
      %2086 = vmatprep.subr.mxu0 0.0
      %2087 = vmatpush1.msra.mxu0 0.0
      %2088 = vmatprep.subr.mxu0 0.0
      %2089 = vmatpush1.msra.mxu0 0.0
      %2090 = vmatprep.subr.mxu0 0.0
      %2091 = vmatpush1.msra.mxu0 0.0
      %2092 = vmatprep.subr.mxu0 0.0
      %2093 = vmatpush1.msra.mxu0 0.0
      %2094 = vmatprep.subr.mxu0 0.0
      %2095 = vmatpush1.msra.mxu0 0.0
      %2096 = vmatprep.subr.mxu0 0.0
      %2097 = vmatpush1.msra.mxu0 0.0
      %2098 = vmatprep.subr.mxu0 0.0
      %2099 = vmatpush1.msra.mxu0 0.0
      %2100 = vmatprep.subr.mxu0 0.0
      %2101 = vmatpush1.msra.mxu0 0.0
      %2102 = vmatprep.subr.mxu0 0.0
      %2103 = vmatpush1.msra.mxu0 0.0
      %2104 = vmatprep.subr.mxu0 0.0
      %2105 = vmatpush1.msra.mxu0 0.0
      %2106 = vmatprep.subr.mxu0 0.0
      %2107 = vmatpush1.msra.mxu0 0.0
      %2108 = vmatprep.subr.mxu0 0.0
      %2109 = vmatpush1.msra.mxu0 0.0
      %2110 = vmatprep.subr.mxu0 0.0
      %2111 = vmatpush1.msra.mxu0 0.0
      %2112 = vmatprep.subr.mxu0 0.0
      %2113 = vmatpush1.msra.mxu0 0.0
      %2114 = vmatprep.subr.mxu0 0.0
      %2115 = vmatpush1.msra.mxu0 0.0
      %2116 = vmatprep.subr.mxu0 0.0
      %2117 = vmatpush1.msra.mxu0 0.0
      %2118 = vmatprep.subr.mxu0 0.0
      %2119 = vmatpush1.msra.mxu0 0.0
      %2120 = vmatprep.subr.mxu0 0.0
      %2121 = vmatpush1.msra.mxu0 0.0
      %2122 = vmatprep.subr.mxu0 0.0
      %2123 = vmatpush1.msra.mxu0 0.0
      %2124 = vmatprep.subr.mxu0 0.0
      %2125 = vmatpush1.msra.mxu0 0.0
      %2126 = vmatprep.subr.mxu0 0.0
      %2127 = vmatpush1.msra.mxu0 0.0
      %2128 = vmatprep.mubr.f32.mxu0 0.0
      %2129 = vmatmul.mubr.f32.gmra.mrb[0].mxu0 %v2056
      %v2130 = vpop.f32.mrb[0].mxu0
      %v2131 = vadd.f32 %v2039, %v2130
      %v2132 = vpop.f32.mrb[0].mxu0
      %v2133 = vadd.f32 %v2041, %v2132
      %2134 = vmatprep.mubr.f32.mxu0 0.0
      %2135 = vmatmul.mubr.f32.gmra.mrb[0].mxu0 %v2059
      %v2136 = vpop.f32.mrb[0].mxu0
      %v2137 = vadd.f32 %v2045, %v2136
      %v2138 = vpop.f32.mrb[0].mxu0
      %v2139 = vadd.f32 %v2047, %v2138
      %2140 = vmatprep.mubr.f32.mxu0 0.0
      %2141 = vmatmul.mubr.f32.gmra.mrb[0].mxu0 %v2062
      %v2142 = vpop.f32.mrb[0].mxu0
      %v2143 = vadd.f32 %v2051, %v2142
      %v2144 = vpop.f32.mrb[0].mxu0
      %v2145 = vadd.f32 %v2053, %v2144
      %2146 = vdwg.mxu0
      %v2147 = vld [vmem:[%s13] sm:$0xff]
      %v2148 = vld [vmem:[%s13 + $0x8] sm:$0xff]
      %v2149 = vld [vmem:[%s13 + $0x10] sm:$0xff]
      %2151 = vset.pattern.permute.xlu0 0
      %2152 = vperm.xlu0 %2151, %v2147
      %v2153 = vpop.permute.xlu0 %2152
      %2156 = vset.pattern.permute.xlu0 0
      %2157 = vperm.xlu0 %2156, %v2148
      %v2158 = vpop.permute.xlu0 %2157
      %2161 = vset.pattern.permute.xlu0 0
      %2162 = vperm.xlu0 %2161, %v2149
      %v2163 = vpop.permute.xlu0 %2162
      %v2165 = vadd.f32 %v2131, %v2153
      %v2166 = vadd.f32 %v2133, %v2153
      %v2167 = vadd.f32 %v2137, %v2158
      %v2168 = vadd.f32 %v2139, %v2158
      %v2169 = vadd.f32 %v2143, %v2163
      %v2170 = vadd.f32 %v2145, %v2163
      %v2171 = vxor.u32 %v2165, 2147483648
      %v2172 = vxor.u32 %v2166, 2147483648
      %v2173 = vxor.u32 %v2167, 2147483648
      %v2174 = vxor.u32 %v2168, 2147483648
      %v2175 = vxor.u32 %v2169, 2147483648
      %v2176 = vxor.u32 %v2170, 2147483648
      %v2177 = vmul.f32 %v2171, 1.442695
      %v2178 = vpow.pop %v2177
      %v2179 = vmul.f32 %v2172, 1.442695
      %v2180 = vpow.pop %v2179
      %v2181 = vmul.f32 %v2173, 1.442695
      %v2182 = vpow.pop %v2181
      %v2183 = vmul.f32 %v2174, 1.442695
      %v2184 = vpow.pop %v2183
      %v2185 = vmul.f32 %v2175, 1.442695
      %v2186 = vpow.pop %v2185
      %v2187 = vmul.f32 %v2176, 1.442695
      %v2188 = vpow.pop %v2187
      %v2189 = vadd.f32 %v2178, 1.0
      %v2190 = vadd.f32 %v2180, 1.0
      %v2191 = vadd.f32 %v2182, 1.0
      %v2192 = vadd.f32 %v2184, 1.0
      %v2193 = vadd.f32 %v2186, 1.0
      %v2194 = vadd.f32 %v2188, 1.0
      %v2195 = vrcp.pop %v2189
      %v2196 = vmul.f32 1.0, %v2195
      %v2197 = vrcp.pop %v2190
      %v2198 = vmul.f32 1.0, %v2197
      %v2199 = vrcp.pop %v2191
      %v2200 = vmul.f32 1.0, %v2199
      %v2201 = vrcp.pop %v2192
      %v2202 = vmul.f32 1.0, %v2201
      %v2203 = vrcp.pop %v2193
      %v2204 = vmul.f32 1.0, %v2203
      %v2205 = vrcp.pop %v2194
      %v2206 = vmul.f32 1.0, %v2205
      %v2207 = vmul.f32 %v1954, %v2196
      %v2208 = vmul.f32 %v1955, %v2198
      %v2209 = vadd.f32 %v768, %v2207
      %v2210 = vadd.f32 %v769, %v2208
      %2211 = vst [vmem:[%s734] sm:$0xff] %v2209
      %2212 = vst [vmem:[%s734 + $0x8] sm:$0xff] %v2210
      %v2213 = vmul.f32 %v1954, %v2200
      %v2214 = vmul.f32 %v1955, %v2202
      %v2215 = vadd.f32 %v770, %v2213
      %v2216 = vadd.f32 %v771, %v2214
      %2217 = vst [vmem:[%s744] sm:$0xff] %v2215
      %2218 = vst [vmem:[%s744 + $0x8] sm:$0xff] %v2216
      %v2219 = vmul.f32 %v1954, %v2204
      %v2220 = vmul.f32 %v1955, %v2206
      %v2221 = vadd.f32 %v772, %v2219
      %v2222 = vadd.f32 %v773, %v2220
      %2223 = vst [vmem:[%s754] sm:$0xff] %v2221
      %2224 = vst [vmem:[%s754 + $0x8] sm:$0xff] %v2222
      %2225 = vst [vmem:[%s764] sm:$0xff] %v1648
      %2226 = vst [vmem:[%s764 + $0x8] sm:$0xff] %v1649
      %s2227 = smul.u32 2, %s34
      %p2228 = scmp.lt.s32.totalorder %s33, 1
      %s2229 = scalar_select %p2228, %s33, 1
      %p2230 = scmp.lt.s32.totalorder %s2227, 1
      %s2231 = scalar_select %p2230, %s2227, 1
      %s2232 = smul.addr %s2229, 2
      %s2233 = sadd.s32 %s2231, %s2232
      %s2234 = smul.addr %s2233, 8
      %s2235 = scalar_lea.vmem %s14, %s2234
      %s2236 = smul.u32 2, %s34
      %p2237 = scmp.lt.s32.totalorder %s33, 1
      %s2238 = scalar_select %p2237, %s33, 1
      %p2239 = scmp.lt.s32.totalorder %s2236, 1
      %s2240 = scalar_select %p2239, %s2236, 1
      %s2241 = smul.addr %s2238, 2
      %s2242 = sadd.s32 %s2240, %s2241
      %s2243 = smul.addr %s2242, 8
      %s2244 = scalar_lea.vmem %s15, %s2243
      %s2245 = smul.u32 2, %s34
      %p2246 = scmp.lt.s32.totalorder %s33, 1
      %s2247 = scalar_select %p2246, %s33, 1
      %p2248 = scmp.lt.s32.totalorder %s2245, 1
      %s2249 = scalar_select %p2248, %s2245, 1
      %s2250 = smul.addr %s2247, 2
      %s2251 = sadd.s32 %s2249, %s2250
      %s2252 = smul.addr %s2251, 8
      %s2253 = scalar_lea.vmem %s16, %s2252
      %s2254 = smul.u32 2, %s34
      %p2255 = scmp.lt.s32.totalorder %s33, 1
      %s2256 = scalar_select %p2255, %s33, 1
      %p2257 = scmp.lt.s32.totalorder %s2254, 1
      %s2258 = scalar_select %p2257, %s2254, 1
      %s2259 = smul.addr %s2256, 2
      %s2260 = sadd.s32 %s2258, %s2259
      %s2261 = smul.addr %s2260, 8
      %s2262 = scalar_lea.vmem %s17, %s2261
      // Predicated region
      $region77: #{block_rgbt_2to1_forward.1} parent=75 // pred_check
        %p2263 = pneg %p383
      $region78: #{block_rgbt_2to1_forward.1} parent=75 // pred_check_branch
        %2265 = sbr.rel (%p2263) target = $region80
      $region79: #{block_rgbt_2to1_forward.1} parent=75 // pred_region
        %s2266 = smul.u32 2, %s34
      $region80: #{block_rgbt_2to1_forward.1} parent=75 // pred_fallthru
        _
      // Predicated region
      $region81: #{block_rgbt_2to1_forward.1} parent=75 // pred_check
        %p2267 = pneg %p411
      $region82: #{block_rgbt_2to1_forward.1} parent=75 // pred_check_branch
        %2269 = sbr.rel (%p2267) target = $region84
      $region83: #{block_rgbt_2to1_forward.1} parent=75 // pred_region
        %s2270 = smul.u32 2, %s34
      $region84: #{block_rgbt_2to1_forward.1} parent=75 // pred_fallthru
        _
      // Predicated region
      $region85: #{block_rgbt_2to1_forward.1} parent=75 // pred_check
        %p2271 = pneg %p439
      $region86: #{block_rgbt_2to1_forward.1} parent=75 // pred_check_branch
        %2273 = sbr.rel (%p2271) target = $region88
      $region87: #{block_rgbt_2to1_forward.1} parent=75 // pred_region
        %s2274 = smul.u32 2, %s34
      $region88: #{block_rgbt_2to1_forward.1} parent=75 // pred_fallthru
        _
      // Predicated region
      $region89: #{block_rgbt_2to1_forward.1} parent=75 // pred_check
        %p2275 = pneg %p467
      $region90: #{block_rgbt_2to1_forward.1} parent=75 // pred_check_branch
        %2277 = sbr.rel (%p2275) target = $region92
      $region91: #{block_rgbt_2to1_forward.1} parent=75 // pred_region
        %s2278 = smul.u32 2, %s34
      $region92: #{block_rgbt_2to1_forward.1} parent=75 // pred_fallthru
        _
    $region76: #{block_rgbt_2to1_forward.1} parent=5 // pred_fallthru
      _
    %p2279 = scmp.le.s32.totalorder 2, %s24
    // Predicated region
    $region93: #{block_rgbt_2to1_forward.1} parent=5 // pred_check
      %p2280 = pneg %p2279
    $region94: #{block_rgbt_2to1_forward.1} parent=5 // pred_check_branch
      %2282 = sbr.rel (%p2280) target = $region96
    $region95: #{block_rgbt_2to1_forward.1} parent=5 // pred_region
      %s2283 = ssub.s32 %s24, 2
      // Predicated region
      $region97: #{block_rgbt_2to1_forward.1} parent=95 // pred_check
        %p2284 = pneg %p389
      $region98: #{block_rgbt_2to1_forward.1} parent=95 // pred_check_branch
        %2286 = sbr.rel (%p2284) target = $region100
      $region99: #{block_rgbt_2to1_forward.1} parent=95 // pred_region
        %s2287 = smul.u32 2, %s36
        %p2288 = scmp.lt.s32.totalorder %s35, 1
        %s2289 = scalar_select %p2288, %s35, 1
        %p2290 = scmp.lt.s32.totalorder %s2287, 1
        %s2291 = scalar_select %p2290, %s2287, 1
        %s2292 = smul.addr %s2289, 2
        %s2293 = sadd.s32 %s2291, %s2292
        %s2294 = smul.addr %s2293, 8
        %s2295 = scalar_lea.vmem %s14, %s2294
      $region100: #{block_rgbt_2to1_forward.1} parent=95 // pred_fallthru
        _
      // Predicated region
      $region101: #{block_rgbt_2to1_forward.1} parent=95 // pred_check
        %p2296 = pneg %p417
      $region102: #{block_rgbt_2to1_forward.1} parent=95 // pred_check_branch
        %2298 = sbr.rel (%p2296) target = $region104
      $region103: #{block_rgbt_2to1_forward.1} parent=95 // pred_region
        %s2299 = smul.u32 2, %s36
        %p2300 = scmp.lt.s32.totalorder %s35, 1
        %s2301 = scalar_select %p2300, %s35, 1
        %p2302 = scmp.lt.s32.totalorder %s2299, 1
        %s2303 = scalar_select %p2302, %s2299, 1
        %s2304 = smul.addr %s2301, 2
        %s2305 = sadd.s32 %s2303, %s2304
        %s2306 = smul.addr %s2305, 8
        %s2307 = scalar_lea.vmem %s15, %s2306
      $region104: #{block_rgbt_2to1_forward.1} parent=95 // pred_fallthru
        _
      // Predicated region
      $region105: #{block_rgbt_2to1_forward.1} parent=95 // pred_check
        %p2308 = pneg %p445
      $region106: #{block_rgbt_2to1_forward.1} parent=95 // pred_check_branch
        %2310 = sbr.rel (%p2308) target = $region108
      $region107: #{block_rgbt_2to1_forward.1} parent=95 // pred_region
        %s2311 = smul.u32 2, %s36
        %p2312 = scmp.lt.s32.totalorder %s35, 1
        %s2313 = scalar_select %p2312, %s35, 1
        %p2314 = scmp.lt.s32.totalorder %s2311, 1
        %s2315 = scalar_select %p2314, %s2311, 1
        %s2316 = smul.addr %s2313, 2
        %s2317 = sadd.s32 %s2315, %s2316
        %s2318 = smul.addr %s2317, 8
        %s2319 = scalar_lea.vmem %s16, %s2318
      $region108: #{block_rgbt_2to1_forward.1} parent=95 // pred_fallthru
        _
      // Predicated region
      $region109: #{block_rgbt_2to1_forward.1} parent=95 // pred_check
        %p2320 = pneg %p473
      $region110: #{block_rgbt_2to1_forward.1} parent=95 // pred_check_branch
        %2322 = sbr.rel (%p2320) target = $region112
      $region111: #{block_rgbt_2to1_forward.1} parent=95 // pred_region
        %s2323 = smul.u32 2, %s36
        %p2324 = scmp.lt.s32.totalorder %s35, 1
        %s2325 = scalar_select %p2324, %s35, 1
        %p2326 = scmp.lt.s32.totalorder %s2323, 1
        %s2327 = scalar_select %p2326, %s2323, 1
        %s2328 = smul.addr %s2325, 2
        %s2329 = sadd.s32 %s2327, %s2328
        %s2330 = smul.addr %s2329, 8
        %s2331 = scalar_lea.vmem %s17, %s2330
      $region112: #{block_rgbt_2to1_forward.1} parent=95 // pred_fallthru
        _
    $region96: #{block_rgbt_2to1_forward.1} parent=5 // pred_fallthru
      _
  $region6: #{block_rgbt_2to1_forward.1} parent=0 // loop_footer
    %s28 = sadd.s32 1, %s24
  $region7: #{block_rgbt_2to1_forward.1} parent=0 // loop_footer_branch
    %23 = sbr.rel target = $region3
  $region8: #{block_rgbt_2to1_forward.1} parent=0 // loop_exit
    _

</llo_original>
